<compile_context>
chip_gen: v5e
topology: v5e:2x2
jax: 0.10.0
libtpu: 0.0.40
codegen_flags: <defaults>
</compile_context>

<pallas_src>
import jax
import jax.numpy as jnp
import numpy as np
from jax.experimental import pallas as pl
from jax.experimental.pallas import tpu as pltpu

ALPHA = 0.01  # F.leaky_relu default negative slope


def _leaky(v):
    return jnp.where(v >= 0, v, ALPHA * v)


def dense_up_block(prev_feature_map, x, p, *, up_stride=2):
    """prev_feature_map: (N, skip_c, 2H, 2W), x: (N, in_c, H, W)  [NCHW].
    Returns out: (N, out_c, 2H, 2W)."""
    assert up_stride == 2
    N, in_c, H, W = x.shape
    Np, skip_c, H2, W2 = prev_feature_map.shape
    assert Np == N and H2 == 2 * H and W2 == 2 * W
    out_c = p['b11'].shape[0]
    HW2 = H2 * W2

    # Zero-stuff the low-res x onto the high-res flat grid (layout plumbing
    # only; all interpolation arithmetic happens inside the kernel).
    xs = jnp.zeros((N, in_c, H2, W2), x.dtype).at[:, :, ::2, ::2].set(x)
    xs = xs.reshape(N, in_c, HW2)
    prev = prev_feature_map.reshape(N, skip_c, HW2)

    # 1x1 convs as (Cout, Cin); 3x3 convs as im2col (Cout, 9*Cin); bias (Cout,1)
    w12 = jnp.transpose(p['w12'], (0, 2, 3, 1)).reshape(out_c, 9 * out_c)
    w22 = jnp.transpose(p['w22'], (0, 2, 3, 1)).reshape(out_c, 9 * out_c)
    cvec = lambda b: b.reshape(-1, 1)

    inputs = [xs, prev,
              p['w11'], cvec(p['b11']), w12, cvec(p['b12']),
              p['w21'], cvec(p['b21']), w22, cvec(p['b22'])]

    def kernel(xs_ref, pv_ref, w11_ref, b11_ref, w12_ref, b12_ref,
               w21_ref, b21_ref, w22_ref, b22_ref, out_ref):
        lane = jax.lax.broadcasted_iota(jnp.int32, (1, HW2), 1)
        colx = lane % W2                      # W2 is a power of two -> cheap

        def shift(a, dy, dx):
            # out[p] = a[p + dy*W2 + dx]; zero where (row+dy, col+dx) leaves
            # the image.  End-of-array positions are zero-filled by the
            # concat, so only a column-validity mask is ever needed.
            s = dy * W2 + dx
            if s == 0:
                sh = a
            elif s > 0:
                sh = jnp.concatenate(
                    [a[:, s:], jnp.zeros((a.shape[0], s), a.dtype)], axis=1)
            else:
                sh = jnp.concatenate(
                    [jnp.zeros((a.shape[0], -s), a.dtype), a[:, :s]], axis=1)
            if dx == 0:
                return sh
            ok = (colx < W2 - dx) if dx > 0 else (colx >= -dx)
            return jnp.where(ok, sh, 0.0)

        def upsample2x(z):
            # 2x bilinear (align_corners=False) on the zero-stuffed grid:
            # separable [1/4, 3/4, 3/4, 1/4] filter + edge-clamp corrections.
            rm1 = shift(z, -1, 0)
            r = (0.25 * shift(z, -2, 0) + 0.75 * rm1 + 0.75 * z
                 + 0.25 * shift(z, 1, 0))
            r = (r + jnp.where(lane < W2, 0.25 * z, 0.0)
                 + jnp.where(lane >= HW2 - W2, 0.25 * rm1, 0.0))
            cm1 = shift(r, 0, -1)
            o = (0.25 * shift(r, 0, -2) + 0.75 * cm1 + 0.75 * r
                 + 0.25 * shift(r, 0, 1))
            o = (o + jnp.where(colx == 0, 0.25 * r, 0.0)
                 + jnp.where(colx == W2 - 1, 0.25 * cm1, 0.0))
            return o

        def conv3x3(feat, w, b):
            # im2col: one (Cout, 9*Cin) @ (9*Cin, HW2) matmul instead of 9
            # tiny K=Cin matmuls.
            taps = [shift(feat, dy, dx)
                    for dy in (-1, 0, 1) for dx in (-1, 0, 1)]
            im2col = jnp.concatenate(taps, axis=0)
            return jnp.dot(w, im2col,
                           preferred_element_type=jnp.float32) + b

        x_up = upsample2x(xs_ref[0])                        # (in_c, HW2)
        xcat = jnp.concatenate([x_up, pv_ref[0]], axis=0)   # (in_c+skip_c, HW2)

        # x1 = act(conv12(conv11(cat([x_up, prev]))))
        y11 = jnp.dot(w11_ref[...], xcat,
                      preferred_element_type=jnp.float32) + b11_ref[...]
        x1 = _leaky(conv3x3(y11, w12_ref[...], b12_ref[...]))

        # out = act(conv22(conv21(cat([x_up, prev, x1]))))
        x21 = jnp.concatenate([xcat, x1], axis=0)
        y21 = jnp.dot(w21_ref[...], x21,
                      preferred_element_type=jnp.float32) + b21_ref[...]
        out_ref[0] = _leaky(conv3x3(y21, w22_ref[...], b22_ref[...])
                            ).astype(out_ref.dtype)

    def full(a):
        nd = a.ndim
        return pl.BlockSpec(a.shape, lambda n: (0,) * nd)

    in_specs = [pl.BlockSpec((1, in_c, HW2), lambda n: (n, 0, 0)),
                pl.BlockSpec((1, skip_c, HW2), lambda n: (n, 0, 0))]
    in_specs += [full(a) for a in inputs[2:]]

    grid_spec = pltpu.PrefetchScalarGridSpec(
        num_scalar_prefetch=0,
        grid=(N,),
        in_specs=in_specs,
        out_specs=pl.BlockSpec((1, out_c, HW2), lambda n: (n, 0, 0)))

    out_flat = pl.pallas_call(
        kernel,
        out_shape=jax.ShapeDtypeStruct((N, out_c, HW2), jnp.float32),
        grid_spec=grid_spec,
        compiler_params=pltpu.CompilerParams(
            dimension_semantics=("parallel",)),   # batch items independent
    )(*inputs)
    return out_flat.reshape(N, out_c, H2, W2)


def init_params(key, skip_c, in_c, out_c):
    ks = jax.random.split(key, 8)

    def u(k, shape, fan_in):
        b = 1.0 / np.sqrt(fan_in)
        return jax.random.uniform(k, shape, jnp.float32, -b, b)

    c11 = skip_c + in_c
    c21 = skip_c + in_c + out_c
    return {
        'w11': u(ks[0], (out_c, c11), c11),            # conv11 1x1  (OI)
        'b11': u(ks[1], (out_c,), c11),
        'w12': u(ks[2], (out_c, out_c, 3, 3), 9 * out_c),   # conv12 3x3 (OIHW)
        'b12': u(ks[3], (out_c,), 9 * out_c),
        'w21': u(ks[4], (out_c, c21), c21),            # conv21 1x1
        'b21': u(ks[5], (out_c,), c21),
        'w22': u(ks[6], (out_c, out_c, 3, 3), 9 * out_c),   # conv22 3x3
        'b22': u(ks[7], (out_c,), 9 * out_c),
    }


def _upsample_matrix(n_in, scale=2):
    # Exact PyTorch bilinear (align_corners=False) sampling weights.
    n_out = n_in * scale
    U = np.zeros((n_out, n_in), np.float32)
    for i in range(n_out):
        src = max((i + 0.5) / scale - 0.5, 0.0)
        i0 = min(int(np.floor(src)), n_in - 1)
        i1 = i0 + 1 if i0 < n_in - 1 else i0
        l1 = src - i0
        U[i, i0] += 1.0 - l1
        U[i, i1] += l1
    return jnp.asarray(U)


def reference_forward(prev, x, p):
    """Plain-JAX NCHW reference matching the PyTorch forward."""
    N, in_c, H, W = x.shape
    Uh, Uw = _upsample_matrix(H), _upsample_matrix(W)
    x_up = jnp.einsum('uh,nchw,vw->ncuv', Uh, x, Uw)
    xcat = jnp.concatenate([x_up, prev], axis=1)

    def conv1x1(v, w, b):
        return jnp.einsum('oc,nchw->nohw', w, v) + b[None, :, None, None]

    def conv3x3(v, w, b):
        y = jax.lax.conv_general_dilated(
            v, w, window_strides=(1, 1), padding='SAME',
            dimension_numbers=('NCHW', 'OIHW', 'NCHW'))
        return y + b[None, :, None, None]

    x1 = _leaky(conv3x3(conv1x1(xcat, p['w11'], p['b11']), p['w12'], p['b12']))
    x21 = jnp.concatenate([xcat, x1], axis=1)
    return _leaky(conv3x3(conv1x1(x21, p['w21'], p['b21']), p['w22'], p['b22']))


if __name__ == "__main__":
    key = jax.random.PRNGKey(0)
    kp, kx, ks = jax.random.split(key, 3)
    N, skip_c, in_c, out_c = 2, 8, 8, 8
    H = W = 16                                  # low-res; prev/out are 32x32

    x = jax.random.normal(kx, (N, in_c, H, W), jnp.float32)          # NCHW
    prev = jax.random.normal(ks, (N, skip_c, 2 * H, 2 * W), jnp.float32)
    params = init_params(kp, skip_c, in_c, out_c)

    out = dense_up_block(prev, x, params, up_stride=2)
    out = jax.block_until_ready(out)

    ref = reference_forward(prev, x, params)
    np.testing.assert_allclose(np.asarray(out), np.asarray(ref),
                               rtol=1e-3, atol=1e-4)
    print("KERNEL_OK")
</pallas_src>

<mosaic_0001>
module attributes {stable_mosaic.version = 11 : i64} {
  func.func @kernel(%arg0: i32, %arg1: memref<1x8x1024xf32, #tpu.memory_space<vmem>>, %arg2: memref<1x8x1024xf32, #tpu.memory_space<vmem>>, %arg3: memref<8x16xf32, #tpu.memory_space<vmem>>, %arg4: memref<8x1xf32, #tpu.memory_space<vmem>>, %arg5: memref<8x72xf32, #tpu.memory_space<vmem>>, %arg6: memref<8x1xf32, #tpu.memory_space<vmem>>, %arg7: memref<8x24xf32, #tpu.memory_space<vmem>>, %arg8: memref<8x1xf32, #tpu.memory_space<vmem>>, %arg9: memref<8x72xf32, #tpu.memory_space<vmem>>, %arg10: memref<8x1xf32, #tpu.memory_space<vmem>>, %arg11: memref<1x8x1024xf32, #tpu.memory_space<vmem>>) attributes {dimension_semantics = [#tpu.dimension_semantics<parallel>], iteration_bounds = array<i64: 2>, scalar_prefetch = 0 : i64, scratch_operands = 0 : i64, tpu.core_type = #tpu.core_type<tc>, window_params = [{transform_indices = @transform_0, window_bounds = array<i64: 1, 8, 1024>}, {transform_indices = @transform_1, window_bounds = array<i64: 1, 8, 1024>}, {pipeline_mode = #tpu.pipeline_mode<synchronous>, transform_indices = @transform_2, window_bounds = array<i64: 8, 16>}, {pipeline_mode = #tpu.pipeline_mode<synchronous>, transform_indices = @transform_3, window_bounds = array<i64: 8, 1>}, {pipeline_mode = #tpu.pipeline_mode<synchronous>, transform_indices = @transform_4, window_bounds = array<i64: 8, 72>}, {pipeline_mode = #tpu.pipeline_mode<synchronous>, transform_indices = @transform_5, window_bounds = array<i64: 8, 1>}, {pipeline_mode = #tpu.pipeline_mode<synchronous>, transform_indices = @transform_6, window_bounds = array<i64: 8, 24>}, {pipeline_mode = #tpu.pipeline_mode<synchronous>, transform_indices = @transform_7, window_bounds = array<i64: 8, 1>}, {pipeline_mode = #tpu.pipeline_mode<synchronous>, transform_indices = @transform_8, window_bounds = array<i64: 8, 72>}, {pipeline_mode = #tpu.pipeline_mode<synchronous>, transform_indices = @transform_9, window_bounds = array<i64: 8, 1>}, {transform_indices = @transform_10, window_bounds = array<i64: 1, 8, 1024>}]} {
    %0 = tpu.iota {dimensions = array<i32: 1>} : vector<1x1024xi32>
    %c32_i32 = arith.constant 32 : i32
    %c0_i32 = arith.constant 0 : i32
    %1 = arith.cmpi eq, %c32_i32, %c0_i32 : i32
    %c1_i32 = arith.constant 1 : i32
    %2 = arith.select %1, %c1_i32, %c32_i32 : i32
    %3 = vector.broadcast %2 : i32 to vector<1x1024xi32>
    %4 = arith.remsi %0, %3 : vector<1x1024xi32>
    %c0_i32_0 = arith.constant 0 : i32
    %5 = vector.broadcast %c0_i32_0 : i32 to vector<1x1024xi32>
    %6 = arith.cmpi ne, %4, %5 : vector<1x1024xi32>
    %c0_i32_1 = arith.constant 0 : i32
    %7 = vector.broadcast %c0_i32_1 : i32 to vector<1x1024xi32>
    %8 = arith.cmpi slt, %4, %7 : vector<1x1024xi32>
    %c0_i32_2 = arith.constant 0 : i32
    %9 = arith.cmpi slt, %2, %c0_i32_2 : i32
    %10 = vector.broadcast %9 : i1 to vector<1x1024xi1>
    %11 = vector.broadcast %10 : vector<1x1024xi1> to vector<1x1024xi1>
    %12 = arith.xori %8, %11 : vector<1x1024xi1>
    %13 = arith.andi %12, %6 : vector<1x1024xi1>
    %14 = vector.broadcast %2 : i32 to vector<1x1024xi32>
    %15 = arith.addi %4, %14 : vector<1x1024xi32>
    %16 = arith.select %13, %15, %4 : vector<1x1024xi1>, vector<1x1024xi32>
    %c0 = arith.constant 0 : index
    %c0_3 = arith.constant 0 : index
    %c0_4 = arith.constant 0 : index
    %17 = vector.load %arg1[%c0, %c0_3, %c0_4] : memref<1x8x1024xf32, #tpu.memory_space<vmem>>, vector<1x8x1024xf32>
    %18 = vector.shape_cast %17 : vector<1x8x1024xf32> to vector<8x1024xf32>
    %cst = arith.constant 0.000000e+00 : f32
    %19 = vector.broadcast %cst : f32 to vector<8x32xf32>
    %20 = vector.extract_strided_slice %18 {offsets = [0, 0], sizes = [8, 992], strides = [1, 1]} : vector<8x1024xf32> to vector<8x992xf32>
    %21 = tpu.concatenate %19, %20 in 1 : vector<8x32xf32>, vector<8x992xf32> -> vector<8x1024xf32>
    %cst_5 = arith.constant 0.000000e+00 : f32
    %22 = vector.broadcast %cst_5 : f32 to vector<8x64xf32>
    %23 = vector.extract_strided_slice %18 {offsets = [0, 0], sizes = [8, 960], strides = [1, 1]} : vector<8x1024xf32> to vector<8x960xf32>
    %24 = tpu.concatenate %22, %23 in 1 : vector<8x64xf32>, vector<8x960xf32> -> vector<8x1024xf32>
    %cst_6 = arith.constant 2.500000e-01 : f32
    %25 = vector.broadcast %cst_6 : f32 to vector<8x1024xf32>
    %26 = arith.mulf %25, %24 : vector<8x1024xf32>
    %cst_7 = arith.constant 7.500000e-01 : f32
    %27 = vector.broadcast %cst_7 : f32 to vector<8x1024xf32>
    %28 = arith.mulf %27, %21 : vector<8x1024xf32>
    %29 = arith.addf %26, %28 : vector<8x1024xf32>
    %cst_8 = arith.constant 7.500000e-01 : f32
    %30 = vector.broadcast %cst_8 : f32 to vector<8x1024xf32>
    %31 = arith.mulf %30, %18 : vector<8x1024xf32>
    %32 = arith.addf %29, %31 : vector<8x1024xf32>
    %33 = vector.extract_strided_slice %18 {offsets = [0, 32], sizes = [8, 992], strides = [1, 1]} : vector<8x1024xf32> to vector<8x992xf32>
    %cst_9 = arith.constant 0.000000e+00 : f32
    %34 = vector.broadcast %cst_9 : f32 to vector<8x32xf32>
    %35 = tpu.concatenate %33, %34 in 1 : vector<8x992xf32>, vector<8x32xf32> -> vector<8x1024xf32>
    %cst_10 = arith.constant 2.500000e-01 : f32
    %36 = vector.broadcast %cst_10 : f32 to vector<8x1024xf32>
    %37 = arith.mulf %36, %35 : vector<8x1024xf32>
    %38 = arith.addf %32, %37 : vector<8x1024xf32>
    %c32_i32_11 = arith.constant 32 : i32
    %39 = vector.broadcast %c32_i32_11 : i32 to vector<1x1024xi32>
    %40 = arith.cmpi slt, %0, %39 : vector<1x1024xi32>
    %cst_12 = arith.constant 2.500000e-01 : f32
    %41 = vector.broadcast %cst_12 : f32 to vector<8x1024xf32>
    %42 = arith.mulf %41, %18 : vector<8x1024xf32>
    %cst_13 = arith.constant 0.000000e+00 : f32
    %43 = vector.shape_cast %40 : vector<1x1024xi1> to vector<1x1024xi1>
    %44 = vector.broadcast %43 : vector<1x1024xi1> to vector<8x1024xi1>
    %45 = vector.broadcast %cst_13 : f32 to vector<8x1024xf32>
    %46 = arith.select %44, %42, %45 : vector<8x1024xi1>, vector<8x1024xf32>
    %47 = arith.addf %38, %46 : vector<8x1024xf32>
    %c992_i32 = arith.constant 992 : i32
    %48 = vector.broadcast %c992_i32 : i32 to vector<1x1024xi32>
    %49 = arith.cmpi sge, %0, %48 : vector<1x1024xi32>
    %cst_14 = arith.constant 2.500000e-01 : f32
    %50 = vector.broadcast %cst_14 : f32 to vector<8x1024xf32>
    %51 = arith.mulf %50, %21 : vector<8x1024xf32>
    %cst_15 = arith.constant 0.000000e+00 : f32
    %52 = vector.shape_cast %49 : vector<1x1024xi1> to vector<1x1024xi1>
    %53 = vector.broadcast %52 : vector<1x1024xi1> to vector<8x1024xi1>
    %54 = vector.broadcast %cst_15 : f32 to vector<8x1024xf32>
    %55 = arith.select %53, %51, %54 : vector<8x1024xi1>, vector<8x1024xf32>
    %56 = arith.addf %47, %55 : vector<8x1024xf32>
    %cst_16 = arith.constant 0.000000e+00 : f32
    %57 = vector.broadcast %cst_16 : f32 to vector<8x1xf32>
    %58 = vector.extract_strided_slice %56 {offsets = [0, 0], sizes = [8, 1023], strides = [1, 1]} : vector<8x1024xf32> to vector<8x1023xf32>
    %59 = tpu.concatenate %57, %58 in 1 : vector<8x1xf32>, vector<8x1023xf32> -> vector<8x1024xf32>
    %c1_i32_17 = arith.constant 1 : i32
    %60 = vector.broadcast %c1_i32_17 : i32 to vector<1x1024xi32>
    %61 = arith.cmpi sge, %16, %60 : vector<1x1024xi32>
    %cst_18 = arith.constant 0.000000e+00 : f32
    %62 = vector.shape_cast %61 : vector<1x1024xi1> to vector<1x1024xi1>
    %63 = vector.broadcast %62 : vector<1x1024xi1> to vector<8x1024xi1>
    %64 = vector.broadcast %cst_18 : f32 to vector<8x1024xf32>
    %65 = arith.select %63, %59, %64 : vector<8x1024xi1>, vector<8x1024xf32>
    %cst_19 = arith.constant 0.000000e+00 : f32
    %66 = vector.broadcast %cst_19 : f32 to vector<8x2xf32>
    %67 = vector.extract_strided_slice %56 {offsets = [0, 0], sizes = [8, 1022], strides = [1, 1]} : vector<8x1024xf32> to vector<8x1022xf32>
    %68 = tpu.concatenate %66, %67 in 1 : vector<8x2xf32>, vector<8x1022xf32> -> vector<8x1024xf32>
    %c2_i32 = arith.constant 2 : i32
    %69 = vector.broadcast %c2_i32 : i32 to vector<1x1024xi32>
    %70 = arith.cmpi sge, %16, %69 : vector<1x1024xi32>
    %cst_20 = arith.constant 0.000000e+00 : f32
    %71 = vector.shape_cast %70 : vector<1x1024xi1> to vector<1x1024xi1>
    %72 = vector.broadcast %71 : vector<1x1024xi1> to vector<8x1024xi1>
    %73 = vector.broadcast %cst_20 : f32 to vector<8x1024xf32>
    %74 = arith.select %72, %68, %73 : vector<8x1024xi1>, vector<8x1024xf32>
    %cst_21 = arith.constant 2.500000e-01 : f32
    %75 = vector.broadcast %cst_21 : f32 to vector<8x1024xf32>
    %76 = arith.mulf %75, %74 : vector<8x1024xf32>
    %cst_22 = arith.constant 7.500000e-01 : f32
    %77 = vector.broadcast %cst_22 : f32 to vector<8x1024xf32>
    %78 = arith.mulf %77, %65 : vector<8x1024xf32>
    %79 = arith.addf %76, %78 : vector<8x1024xf32>
    %cst_23 = arith.constant 7.500000e-01 : f32
    %80 = vector.broadcast %cst_23 : f32 to vector<8x1024xf32>
    %81 = arith.mulf %80, %56 : vector<8x1024xf32>
    %82 = arith.addf %79, %81 : vector<8x1024xf32>
    %83 = vector.extract_strided_slice %56 {offsets = [0, 1], sizes = [8, 1023], strides = [1, 1]} : vector<8x1024xf32> to vector<8x1023xf32>
    %cst_24 = arith.constant 0.000000e+00 : f32
    %84 = vector.broadcast %cst_24 : f32 to vector<8x1xf32>
    %85 = tpu.concatenate %83, %84 in 1 : vector<8x1023xf32>, vector<8x1xf32> -> vector<8x1024xf32>
    %c31_i32 = arith.constant 31 : i32
    %86 = vector.broadcast %c31_i32 : i32 to vector<1x1024xi32>
    %87 = arith.cmpi slt, %16, %86 : vector<1x1024xi32>
    %cst_25 = arith.constant 0.000000e+00 : f32
    %88 = vector.shape_cast %87 : vector<1x1024xi1> to vector<1x1024xi1>
    %89 = vector.broadcast %88 : vector<1x1024xi1> to vector<8x1024xi1>
    %90 = vector.broadcast %cst_25 : f32 to vector<8x1024xf32>
    %91 = arith.select %89, %85, %90 : vector<8x1024xi1>, vector<8x1024xf32>
    %cst_26 = arith.constant 2.500000e-01 : f32
    %92 = vector.broadcast %cst_26 : f32 to vector<8x1024xf32>
    %93 = arith.mulf %92, %91 : vector<8x1024xf32>
    %94 = arith.addf %82, %93 : vector<8x1024xf32>
    %c0_i32_27 = arith.constant 0 : i32
    %95 = vector.broadcast %c0_i32_27 : i32 to vector<1x1024xi32>
    %96 = arith.cmpi eq, %16, %95 : vector<1x1024xi32>
    %cst_28 = arith.constant 2.500000e-01 : f32
    %97 = vector.broadcast %cst_28 : f32 to vector<8x1024xf32>
    %98 = arith.mulf %97, %56 : vector<8x1024xf32>
    %cst_29 = arith.constant 0.000000e+00 : f32
    %99 = vector.shape_cast %96 : vector<1x1024xi1> to vector<1x1024xi1>
    %100 = vector.broadcast %99 : vector<1x1024xi1> to vector<8x1024xi1>
    %101 = vector.broadcast %cst_29 : f32 to vector<8x1024xf32>
    %102 = arith.select %100, %98, %101 : vector<8x1024xi1>, vector<8x1024xf32>
    %103 = arith.addf %94, %102 : vector<8x1024xf32>
    %c31_i32_30 = arith.constant 31 : i32
    %104 = vector.broadcast %c31_i32_30 : i32 to vector<1x1024xi32>
    %105 = arith.cmpi eq, %16, %104 : vector<1x1024xi32>
    %cst_31 = arith.constant 2.500000e-01 : f32
    %106 = vector.broadcast %cst_31 : f32 to vector<8x1024xf32>
    %107 = arith.mulf %106, %65 : vector<8x1024xf32>
    %cst_32 = arith.constant 0.000000e+00 : f32
    %108 = vector.shape_cast %105 : vector<1x1024xi1> to vector<1x1024xi1>
    %109 = vector.broadcast %108 : vector<1x1024xi1> to vector<8x1024xi1>
    %110 = vector.broadcast %cst_32 : f32 to vector<8x1024xf32>
    %111 = arith.select %109, %107, %110 : vector<8x1024xi1>, vector<8x1024xf32>
    %112 = arith.addf %103, %111 : vector<8x1024xf32>
    %c0_33 = arith.constant 0 : index
    %c0_34 = arith.constant 0 : index
    %c0_35 = arith.constant 0 : index
    %113 = vector.load %arg2[%c0_33, %c0_34, %c0_35] : memref<1x8x1024xf32, #tpu.memory_space<vmem>>, vector<1x8x1024xf32>
    %114 = vector.shape_cast %113 : vector<1x8x1024xf32> to vector<8x1024xf32>
    %115 = tpu.concatenate %112, %114 in 0 : vector<8x1024xf32>, vector<8x1024xf32> -> vector<16x1024xf32>
    %c0_36 = arith.constant 0 : index
    %c0_37 = arith.constant 0 : index
    %116 = vector.load %arg3[%c0_36, %c0_37] : memref<8x16xf32, #tpu.memory_space<vmem>>, vector<8x16xf32>
    %cst_38 = arith.constant dense<0.000000e+00> : vector<8x1024xf32>
    %117 = tpu.matmul %116, %115, %cst_38 {dimension_numbers = #tpu.dot_dimension_numbers<[1], [0], [0], [1], [0, 0, 1, 1], [], []>} : vector<8x16xf32>, vector<16x1024xf32>, vector<8x1024xf32> -> vector<8x1024xf32>
    %c0_39 = arith.constant 0 : index
    %c0_40 = arith.constant 0 : index
    %118 = vector.load %arg4[%c0_39, %c0_40] : memref<8x1xf32, #tpu.memory_space<vmem>>, vector<8x1xf32>
    %119 = vector.broadcast %118 : vector<8x1xf32> to vector<8x1024xf32>
    %120 = arith.addf %117, %119 : vector<8x1024xf32>
    %c0_41 = arith.constant 0 : index
    %c0_42 = arith.constant 0 : index
    %121 = vector.load %arg5[%c0_41, %c0_42] : memref<8x72xf32, #tpu.memory_space<vmem>>, vector<8x72xf32>
    %c0_43 = arith.constant 0 : index
    %c0_44 = arith.constant 0 : index
    %122 = vector.load %arg6[%c0_43, %c0_44] : memref<8x1xf32, #tpu.memory_space<vmem>>, vector<8x1xf32>
    %cst_45 = arith.constant 0.000000e+00 : f32
    %123 = vector.broadcast %cst_45 : f32 to vector<8x33xf32>
    %124 = vector.extract_strided_slice %120 {offsets = [0, 0], sizes = [8, 991], strides = [1, 1]} : vector<8x1024xf32> to vector<8x991xf32>
    %125 = tpu.concatenate %123, %124 in 1 : vector<8x33xf32>, vector<8x991xf32> -> vector<8x1024xf32>
    %c1_i32_46 = arith.constant 1 : i32
    %126 = vector.broadcast %c1_i32_46 : i32 to vector<1x1024xi32>
    %127 = arith.cmpi sge, %16, %126 : vector<1x1024xi32>
    %cst_47 = arith.constant 0.000000e+00 : f32
    %128 = vector.shape_cast %127 : vector<1x1024xi1> to vector<1x1024xi1>
    %129 = vector.broadcast %128 : vector<1x1024xi1> to vector<8x1024xi1>
    %130 = vector.broadcast %cst_47 : f32 to vector<8x1024xf32>
    %131 = arith.select %129, %125, %130 : vector<8x1024xi1>, vector<8x1024xf32>
    %cst_48 = arith.constant 0.000000e+00 : f32
    %132 = vector.broadcast %cst_48 : f32 to vector<8x32xf32>
    %133 = vector.extract_strided_slice %120 {offsets = [0, 0], sizes = [8, 992], strides = [1, 1]} : vector<8x1024xf32> to vector<8x992xf32>
    %134 = tpu.concatenate %132, %133 in 1 : vector<8x32xf32>, vector<8x992xf32> -> vector<8x1024xf32>
    %cst_49 = arith.constant 0.000000e+00 : f32
    %135 = vector.broadcast %cst_49 : f32 to vector<8x31xf32>
    %136 = vector.extract_strided_slice %120 {offsets = [0, 0], sizes = [8, 993], strides = [1, 1]} : vector<8x1024xf32> to vector<8x993xf32>
    %137 = tpu.concatenate %135, %136 in 1 : vector<8x31xf32>, vector<8x993xf32> -> vector<8x1024xf32>
    %c31_i32_50 = arith.constant 31 : i32
    %138 = vector.broadcast %c31_i32_50 : i32 to vector<1x1024xi32>
    %139 = arith.cmpi slt, %16, %138 : vector<1x1024xi32>
    %cst_51 = arith.constant 0.000000e+00 : f32
    %140 = vector.shape_cast %139 : vector<1x1024xi1> to vector<1x1024xi1>
    %141 = vector.broadcast %140 : vector<1x1024xi1> to vector<8x1024xi1>
    %142 = vector.broadcast %cst_51 : f32 to vector<8x1024xf32>
    %143 = arith.select %141, %137, %142 : vector<8x1024xi1>, vector<8x1024xf32>
    %cst_52 = arith.constant 0.000000e+00 : f32
    %144 = vector.broadcast %cst_52 : f32 to vector<8x1xf32>
    %145 = vector.extract_strided_slice %120 {offsets = [0, 0], sizes = [8, 1023], strides = [1, 1]} : vector<8x1024xf32> to vector<8x1023xf32>
    %146 = tpu.concatenate %144, %145 in 1 : vector<8x1xf32>, vector<8x1023xf32> -> vector<8x1024xf32>
    %c1_i32_53 = arith.constant 1 : i32
    %147 = vector.broadcast %c1_i32_53 : i32 to vector<1x1024xi32>
    %148 = arith.cmpi sge, %16, %147 : vector<1x1024xi32>
    %cst_54 = arith.constant 0.000000e+00 : f32
    %149 = vector.shape_cast %148 : vector<1x1024xi1> to vector<1x1024xi1>
    %150 = vector.broadcast %149 : vector<1x1024xi1> to vector<8x1024xi1>
    %151 = vector.broadcast %cst_54 : f32 to vector<8x1024xf32>
    %152 = arith.select %150, %146, %151 : vector<8x1024xi1>, vector<8x1024xf32>
    %153 = vector.extract_strided_slice %120 {offsets = [0, 1], sizes = [8, 1023], strides = [1, 1]} : vector<8x1024xf32> to vector<8x1023xf32>
    %cst_55 = arith.constant 0.000000e+00 : f32
    %154 = vector.broadcast %cst_55 : f32 to vector<8x1xf32>
    %155 = tpu.concatenate %153, %154 in 1 : vector<8x1023xf32>, vector<8x1xf32> -> vector<8x1024xf32>
    %c31_i32_56 = arith.constant 31 : i32
    %156 = vector.broadcast %c31_i32_56 : i32 to vector<1x1024xi32>
    %157 = arith.cmpi slt, %16, %156 : vector<1x1024xi32>
    %cst_57 = arith.constant 0.000000e+00 : f32
    %158 = vector.shape_cast %157 : vector<1x1024xi1> to vector<1x1024xi1>
    %159 = vector.broadcast %158 : vector<1x1024xi1> to vector<8x1024xi1>
    %160 = vector.broadcast %cst_57 : f32 to vector<8x1024xf32>
    %161 = arith.select %159, %155, %160 : vector<8x1024xi1>, vector<8x1024xf32>
    %162 = vector.extract_strided_slice %120 {offsets = [0, 31], sizes = [8, 993], strides = [1, 1]} : vector<8x1024xf32> to vector<8x993xf32>
    %cst_58 = arith.constant 0.000000e+00 : f32
    %163 = vector.broadcast %cst_58 : f32 to vector<8x31xf32>
    %164 = tpu.concatenate %162, %163 in 1 : vector<8x993xf32>, vector<8x31xf32> -> vector<8x1024xf32>
    %c1_i32_59 = arith.constant 1 : i32
    %165 = vector.broadcast %c1_i32_59 : i32 to vector<1x1024xi32>
    %166 = arith.cmpi sge, %16, %165 : vector<1x1024xi32>
    %cst_60 = arith.constant 0.000000e+00 : f32
    %167 = vector.shape_cast %166 : vector<1x1024xi1> to vector<1x1024xi1>
    %168 = vector.broadcast %167 : vector<1x1024xi1> to vector<8x1024xi1>
    %169 = vector.broadcast %cst_60 : f32 to vector<8x1024xf32>
    %170 = arith.select %168, %164, %169 : vector<8x1024xi1>, vector<8x1024xf32>
    %171 = vector.extract_strided_slice %120 {offsets = [0, 32], sizes = [8, 992], strides = [1, 1]} : vector<8x1024xf32> to vector<8x992xf32>
    %cst_61 = arith.constant 0.000000e+00 : f32
    %172 = vector.broadcast %cst_61 : f32 to vector<8x32xf32>
    %173 = tpu.concatenate %171, %172 in 1 : vector<8x992xf32>, vector<8x32xf32> -> vector<8x1024xf32>
    %174 = vector.extract_strided_slice %120 {offsets = [0, 33], sizes = [8, 991], strides = [1, 1]} : vector<8x1024xf32> to vector<8x991xf32>
    %cst_62 = arith.constant 0.000000e+00 : f32
    %175 = vector.broadcast %cst_62 : f32 to vector<8x33xf32>
    %176 = tpu.concatenate %174, %175 in 1 : vector<8x991xf32>, vector<8x33xf32> -> vector<8x1024xf32>
    %c31_i32_63 = arith.constant 31 : i32
    %177 = vector.broadcast %c31_i32_63 : i32 to vector<1x1024xi32>
    %178 = arith.cmpi slt, %16, %177 : vector<1x1024xi32>
    %cst_64 = arith.constant 0.000000e+00 : f32
    %179 = vector.shape_cast %178 : vector<1x1024xi1> to vector<1x1024xi1>
    %180 = vector.broadcast %179 : vector<1x1024xi1> to vector<8x1024xi1>
    %181 = vector.broadcast %cst_64 : f32 to vector<8x1024xf32>
    %182 = arith.select %180, %176, %181 : vector<8x1024xi1>, vector<8x1024xf32>
    %183 = tpu.concatenate %131, %134, %143, %152, %120, %161, %170, %173, %182 in 0 : vector<8x1024xf32>, vector<8x1024xf32>, vector<8x1024xf32>, vector<8x1024xf32>, vector<8x1024xf32>, vector<8x1024xf32>, vector<8x1024xf32>, vector<8x1024xf32>, vector<8x1024xf32> -> vector<72x1024xf32>
    %cst_65 = arith.constant dense<0.000000e+00> : vector<8x1024xf32>
    %184 = tpu.matmul %121, %183, %cst_65 {dimension_numbers = #tpu.dot_dimension_numbers<[1], [0], [0], [1], [0, 0, 1, 1], [], []>} : vector<8x72xf32>, vector<72x1024xf32>, vector<8x1024xf32> -> vector<8x1024xf32>
    %185 = vector.broadcast %122 : vector<8x1xf32> to vector<8x1024xf32>
    %186 = arith.addf %184, %185 : vector<8x1024xf32>
    %cst_66 = arith.constant 0.000000e+00 : f32
    %187 = vector.broadcast %cst_66 : f32 to vector<8x1024xf32>
    %188 = arith.cmpf oge, %186, %187 : vector<8x1024xf32>
    %cst_67 = arith.constant 0.00999999977 : f32
    %189 = vector.broadcast %cst_67 : f32 to vector<8x1024xf32>
    %190 = arith.mulf %189, %186 : vector<8x1024xf32>
    %191 = arith.select %188, %186, %190 : vector<8x1024xi1>, vector<8x1024xf32>
    %192 = tpu.concatenate %115, %191 in 0 : vector<16x1024xf32>, vector<8x1024xf32> -> vector<24x1024xf32>
    %c0_68 = arith.constant 0 : index
    %c0_69 = arith.constant 0 : index
    %193 = vector.load %arg7[%c0_68, %c0_69] : memref<8x24xf32, #tpu.memory_space<vmem>>, vector<8x24xf32>
    %cst_70 = arith.constant dense<0.000000e+00> : vector<8x1024xf32>
    %194 = tpu.matmul %193, %192, %cst_70 {dimension_numbers = #tpu.dot_dimension_numbers<[1], [0], [0], [1], [0, 0, 1, 1], [], []>} : vector<8x24xf32>, vector<24x1024xf32>, vector<8x1024xf32> -> vector<8x1024xf32>
    %c0_71 = arith.constant 0 : index
    %c0_72 = arith.constant 0 : index
    %195 = vector.load %arg8[%c0_71, %c0_72] : memref<8x1xf32, #tpu.memory_space<vmem>>, vector<8x1xf32>
    %196 = vector.broadcast %195 : vector<8x1xf32> to vector<8x1024xf32>
    %197 = arith.addf %194, %196 : vector<8x1024xf32>
    %c0_73 = arith.constant 0 : index
    %c0_74 = arith.constant 0 : index
    %198 = vector.load %arg9[%c0_73, %c0_74] : memref<8x72xf32, #tpu.memory_space<vmem>>, vector<8x72xf32>
    %c0_75 = arith.constant 0 : index
    %c0_76 = arith.constant 0 : index
    %199 = vector.load %arg10[%c0_75, %c0_76] : memref<8x1xf32, #tpu.memory_space<vmem>>, vector<8x1xf32>
    %cst_77 = arith.constant 0.000000e+00 : f32
    %200 = vector.broadcast %cst_77 : f32 to vector<8x33xf32>
    %201 = vector.extract_strided_slice %197 {offsets = [0, 0], sizes = [8, 991], strides = [1, 1]} : vector<8x1024xf32> to vector<8x991xf32>
    %202 = tpu.concatenate %200, %201 in 1 : vector<8x33xf32>, vector<8x991xf32> -> vector<8x1024xf32>
    %c1_i32_78 = arith.constant 1 : i32
    %203 = vector.broadcast %c1_i32_78 : i32 to vector<1x1024xi32>
    %204 = arith.cmpi sge, %16, %203 : vector<1x1024xi32>
    %cst_79 = arith.constant 0.000000e+00 : f32
    %205 = vector.shape_cast %204 : vector<1x1024xi1> to vector<1x1024xi1>
    %206 = vector.broadcast %205 : vector<1x1024xi1> to vector<8x1024xi1>
    %207 = vector.broadcast %cst_79 : f32 to vector<8x1024xf32>
    %208 = arith.select %206, %202, %207 : vector<8x1024xi1>, vector<8x1024xf32>
    %cst_80 = arith.constant 0.000000e+00 : f32
    %209 = vector.broadcast %cst_80 : f32 to vector<8x32xf32>
    %210 = vector.extract_strided_slice %197 {offsets = [0, 0], sizes = [8, 992], strides = [1, 1]} : vector<8x1024xf32> to vector<8x992xf32>
    %211 = tpu.concatenate %209, %210 in 1 : vector<8x32xf32>, vector<8x992xf32> -> vector<8x1024xf32>
    %cst_81 = arith.constant 0.000000e+00 : f32
    %212 = vector.broadcast %cst_81 : f32 to vector<8x31xf32>
    %213 = vector.extract_strided_slice %197 {offsets = [0, 0], sizes = [8, 993], strides = [1, 1]} : vector<8x1024xf32> to vector<8x993xf32>
    %214 = tpu.concatenate %212, %213 in 1 : vector<8x31xf32>, vector<8x993xf32> -> vector<8x1024xf32>
    %c31_i32_82 = arith.constant 31 : i32
    %215 = vector.broadcast %c31_i32_82 : i32 to vector<1x1024xi32>
    %216 = arith.cmpi slt, %16, %215 : vector<1x1024xi32>
    %cst_83 = arith.constant 0.000000e+00 : f32
    %217 = vector.shape_cast %216 : vector<1x1024xi1> to vector<1x1024xi1>
    %218 = vector.broadcast %217 : vector<1x1024xi1> to vector<8x1024xi1>
    %219 = vector.broadcast %cst_83 : f32 to vector<8x1024xf32>
    %220 = arith.select %218, %214, %219 : vector<8x1024xi1>, vector<8x1024xf32>
    %cst_84 = arith.constant 0.000000e+00 : f32
    %221 = vector.broadcast %cst_84 : f32 to vector<8x1xf32>
    %222 = vector.extract_strided_slice %197 {offsets = [0, 0], sizes = [8, 1023], strides = [1, 1]} : vector<8x1024xf32> to vector<8x1023xf32>
    %223 = tpu.concatenate %221, %222 in 1 : vector<8x1xf32>, vector<8x1023xf32> -> vector<8x1024xf32>
    %c1_i32_85 = arith.constant 1 : i32
    %224 = vector.broadcast %c1_i32_85 : i32 to vector<1x1024xi32>
    %225 = arith.cmpi sge, %16, %224 : vector<1x1024xi32>
    %cst_86 = arith.constant 0.000000e+00 : f32
    %226 = vector.shape_cast %225 : vector<1x1024xi1> to vector<1x1024xi1>
    %227 = vector.broadcast %226 : vector<1x1024xi1> to vector<8x1024xi1>
    %228 = vector.broadcast %cst_86 : f32 to vector<8x1024xf32>
    %229 = arith.select %227, %223, %228 : vector<8x1024xi1>, vector<8x1024xf32>
    %230 = vector.extract_strided_slice %197 {offsets = [0, 1], sizes = [8, 1023], strides = [1, 1]} : vector<8x1024xf32> to vector<8x1023xf32>
    %cst_87 = arith.constant 0.000000e+00 : f32
    %231 = vector.broadcast %cst_87 : f32 to vector<8x1xf32>
    %232 = tpu.concatenate %230, %231 in 1 : vector<8x1023xf32>, vector<8x1xf32> -> vector<8x1024xf32>
    %c31_i32_88 = arith.constant 31 : i32
    %233 = vector.broadcast %c31_i32_88 : i32 to vector<1x1024xi32>
    %234 = arith.cmpi slt, %16, %233 : vector<1x1024xi32>
    %cst_89 = arith.constant 0.000000e+00 : f32
    %235 = vector.shape_cast %234 : vector<1x1024xi1> to vector<1x1024xi1>
    %236 = vector.broadcast %235 : vector<1x1024xi1> to vector<8x1024xi1>
    %237 = vector.broadcast %cst_89 : f32 to vector<8x1024xf32>
    %238 = arith.select %236, %232, %237 : vector<8x1024xi1>, vector<8x1024xf32>
    %239 = vector.extract_strided_slice %197 {offsets = [0, 31], sizes = [8, 993], strides = [1, 1]} : vector<8x1024xf32> to vector<8x993xf32>
    %cst_90 = arith.constant 0.000000e+00 : f32
    %240 = vector.broadcast %cst_90 : f32 to vector<8x31xf32>
    %241 = tpu.concatenate %239, %240 in 1 : vector<8x993xf32>, vector<8x31xf32> -> vector<8x1024xf32>
    %c1_i32_91 = arith.constant 1 : i32
    %242 = vector.broadcast %c1_i32_91 : i32 to vector<1x1024xi32>
    %243 = arith.cmpi sge, %16, %242 : vector<1x1024xi32>
    %cst_92 = arith.constant 0.000000e+00 : f32
    %244 = vector.shape_cast %243 : vector<1x1024xi1> to vector<1x1024xi1>
    %245 = vector.broadcast %244 : vector<1x1024xi1> to vector<8x1024xi1>
    %246 = vector.broadcast %cst_92 : f32 to vector<8x1024xf32>
    %247 = arith.select %245, %241, %246 : vector<8x1024xi1>, vector<8x1024xf32>
    %248 = vector.extract_strided_slice %197 {offsets = [0, 32], sizes = [8, 992], strides = [1, 1]} : vector<8x1024xf32> to vector<8x992xf32>
    %cst_93 = arith.constant 0.000000e+00 : f32
    %249 = vector.broadcast %cst_93 : f32 to vector<8x32xf32>
    %250 = tpu.concatenate %248, %249 in 1 : vector<8x992xf32>, vector<8x32xf32> -> vector<8x1024xf32>
    %251 = vector.extract_strided_slice %197 {offsets = [0, 33], sizes = [8, 991], strides = [1, 1]} : vector<8x1024xf32> to vector<8x991xf32>
    %cst_94 = arith.constant 0.000000e+00 : f32
    %252 = vector.broadcast %cst_94 : f32 to vector<8x33xf32>
    %253 = tpu.concatenate %251, %252 in 1 : vector<8x991xf32>, vector<8x33xf32> -> vector<8x1024xf32>
    %c31_i32_95 = arith.constant 31 : i32
    %254 = vector.broadcast %c31_i32_95 : i32 to vector<1x1024xi32>
    %255 = arith.cmpi slt, %16, %254 : vector<1x1024xi32>
    %cst_96 = arith.constant 0.000000e+00 : f32
    %256 = vector.shape_cast %255 : vector<1x1024xi1> to vector<1x1024xi1>
    %257 = vector.broadcast %256 : vector<1x1024xi1> to vector<8x1024xi1>
    %258 = vector.broadcast %cst_96 : f32 to vector<8x1024xf32>
    %259 = arith.select %257, %253, %258 : vector<8x1024xi1>, vector<8x1024xf32>
    %260 = tpu.concatenate %208, %211, %220, %229, %197, %238, %247, %250, %259 in 0 : vector<8x1024xf32>, vector<8x1024xf32>, vector<8x1024xf32>, vector<8x1024xf32>, vector<8x1024xf32>, vector<8x1024xf32>, vector<8x1024xf32>, vector<8x1024xf32>, vector<8x1024xf32> -> vector<72x1024xf32>
    %cst_97 = arith.constant dense<0.000000e+00> : vector<8x1024xf32>
    %261 = tpu.matmul %198, %260, %cst_97 {dimension_numbers = #tpu.dot_dimension_numbers<[1], [0], [0], [1], [0, 0, 1, 1], [], []>} : vector<8x72xf32>, vector<72x1024xf32>, vector<8x1024xf32> -> vector<8x1024xf32>
    %262 = vector.broadcast %199 : vector<8x1xf32> to vector<8x1024xf32>
    %263 = arith.addf %261, %262 : vector<8x1024xf32>
    %cst_98 = arith.constant 0.000000e+00 : f32
    %264 = vector.broadcast %cst_98 : f32 to vector<8x1024xf32>
    %265 = arith.cmpf oge, %263, %264 : vector<8x1024xf32>
    %cst_99 = arith.constant 0.00999999977 : f32
    %266 = vector.broadcast %cst_99 : f32 to vector<8x1024xf32>
    %267 = arith.mulf %266, %263 : vector<8x1024xf32>
    %268 = arith.select %265, %263, %267 : vector<8x1024xi1>, vector<8x1024xf32>
    %c0_100 = arith.constant 0 : index
    %c0_101 = arith.constant 0 : index
    %c0_102 = arith.constant 0 : index
    %269 = vector.load %arg11[%c0_100, %c0_101, %c0_102] : memref<1x8x1024xf32, #tpu.memory_space<vmem>>, vector<1x8x1024xf32>
    %270 = vector.shape_cast %269 : vector<1x8x1024xf32> to vector<8x1024xf32>
    %271 = vector.shape_cast %268 : vector<8x1024xf32> to vector<1x8x1024xf32>
    tpu.vector_store %arg11[%c0_100, %c0_101, %c0_102], %271 {strides = array<i32>} : memref<1x8x1024xf32, #tpu.memory_space<vmem>>, vector<1x8x1024xf32>,
    return
  }
  func.func @transform_0(%arg0: i32) -> (i32, i32, i32) {
    %c0_i32 = arith.constant 0 : i32
    %c0_i32_0 = arith.constant 0 : i32
    %c0_i32_1 = arith.constant 0 : i32
    return %arg0, %c0_i32, %c0_i32_0 : i32, i32, i32
  }
  func.func @transform_1(%arg0: i32) -> (i32, i32, i32) {
    %c0_i32 = arith.constant 0 : i32
    %c0_i32_0 = arith.constant 0 : i32
    %c0_i32_1 = arith.constant 0 : i32
    return %arg0, %c0_i32, %c0_i32_0 : i32, i32, i32
  }
  func.func @transform_2(%arg0: i32) -> (i32, i32) {
    %c0_i32 = arith.constant 0 : i32
    %c0_i32_0 = arith.constant 0 : i32
    %c0_i32_1 = arith.constant 0 : i32
    return %c0_i32, %c0_i32_0 : i32, i32
  }
  func.func @transform_3(%arg0: i32) -> (i32, i32) {
    %c0_i32 = arith.constant 0 : i32
    %c0_i32_0 = arith.constant 0 : i32
    %c0_i32_1 = arith.constant 0 : i32
    return %c0_i32, %c0_i32_0 : i32, i32
  }
  func.func @transform_4(%arg0: i32) -> (i32, i32) {
    %c0_i32 = arith.constant 0 : i32
    %c0_i32_0 = arith.constant 0 : i32
    %c0_i32_1 = arith.constant 0 : i32
    return %c0_i32, %c0_i32_0 : i32, i32
  }
  func.func @transform_5(%arg0: i32) -> (i32, i32) {
    %c0_i32 = arith.constant 0 : i32
    %c0_i32_0 = arith.constant 0 : i32
    %c0_i32_1 = arith.constant 0 : i32
    return %c0_i32, %c0_i32_0 : i32, i32
  }
  func.func @transform_6(%arg0: i32) -> (i32, i32) {
    %c0_i32 = arith.constant 0 : i32
    %c0_i32_0 = arith.constant 0 : i32
    %c0_i32_1 = arith.constant 0 : i32
    return %c0_i32, %c0_i32_0 : i32, i32
  }
  func.func @transform_7(%arg0: i32) -> (i32, i32) {
    %c0_i32 = arith.constant 0 : i32
    %c0_i32_0 = arith.constant 0 : i32
    %c0_i32_1 = arith.constant 0 : i32
    return %c0_i32, %c0_i32_0 : i32, i32
  }
  func.func @transform_8(%arg0: i32) -> (i32, i32) {
    %c0_i32 = arith.constant 0 : i32
    %c0_i32_0 = arith.constant 0 : i32
    %c0_i32_1 = arith.constant 0 : i32
    return %c0_i32, %c0_i32_0 : i32, i32
  }
  func.func @transform_9(%arg0: i32) -> (i32, i32) {
    %c0_i32 = arith.constant 0 : i32
    %c0_i32_0 = arith.constant 0 : i32
    %c0_i32_1 = arith.constant 0 : i32
    return %c0_i32, %c0_i32_0 : i32, i32
  }
  func.func @transform_10(%arg0: i32) -> (i32, i32, i32) {
    %c0_i32 = arith.constant 0 : i32
    %c0_i32_0 = arith.constant 0 : i32
    %c0_i32_1 = arith.constant 0 : i32
    return %arg0, %c0_i32, %c0_i32_0 : i32, i32, i32
  }
}

</mosaic_0001>

<llo_original>
// kernel: tpu_custom_call.1
$region0: #{tpu_custom_call.1}
  #allocation0 [shape = 'u32[]', space=smem, size = 0x4, offset = 0x4, fixed_abs, tag = 'smem constant byte address 0x4 - core index']
  #allocation1 [shape = 'u32[72,128]{1,0:T(1,128)}', space=vmem, size = 0x9000, scoped, tag = 'internal scratch']
  %s0 = inlined_call_operand.hbm [shape: f32[2,8,1024], index: 0, kind: input, shape index: {}]
  %s1 = inlined_call_operand.hbm [shape: f32[2,8,1024], index: 1, kind: input, shape index: {}]
  %s2 = inlined_call_operand.vmem [shape: f32[8,16], index: 2, kind: input, shape index: {}]
  %s3 = inlined_call_operand.vmem [shape: f32[8,1], index: 3, kind: input, shape index: {}]
  %s4 = inlined_call_operand.vmem [shape: f32[8,72], index: 4, kind: input, shape index: {}]
  %s5 = inlined_call_operand.vmem [shape: f32[8,1], index: 5, kind: input, shape index: {}]
  %s6 = inlined_call_operand.vmem [shape: f32[8,24], index: 6, kind: input, shape index: {}]
  %s7 = inlined_call_operand.vmem [shape: f32[8,1], index: 7, kind: input, shape index: {}]
  %s8 = inlined_call_operand.vmem [shape: f32[8,72], index: 8, kind: input, shape index: {}]
  %s9 = inlined_call_operand.vmem [shape: f32[8,1], index: 9, kind: input, shape index: {}]
  %s10 = inlined_call_operand.hbm [shape: f32[2,8,1024], index: 10, kind: output, shape index: {}]
  %s11 = sld [smem:[#allocation0]]
  $region81: #{tpu_custom_call.1} parent=0
    _
  %s13 = ssub.s32 1, %s11
  %s14 = scalar_select 0, %s13, %s11
  $region1: #{tpu_custom_call.1} parent=0
    #allocation2 [shape = 'u8[65536]{0}', space=vmem, size = 0x10000, scoped, tag = 'input window, operand 0']
    #allocation3 [shape = 's32[2]{0}', space=sflag, size = 0x8, scoped, tag = 'scoped memory for tpu_custom_call.1']
    #allocation4 [shape = 's32[2]{0}', space=sflag, size = 0x8, scoped, tag = 'scoped memory for tpu_custom_call.1']
    #allocation5 [shape = 'u8[65536]{0}', space=vmem, size = 0x10000, scoped, tag = 'input window, operand 1']
    #allocation6 [shape = 's32[2]{0}', space=sflag, size = 0x8, scoped, tag = 'scoped memory for tpu_custom_call.1']
    #allocation7 [shape = 'u8[65536]{0}', space=vmem, size = 0x10000, scoped, tag = 'output window, operand 0']
    %15 = vsyncpa [#allocation3], 0
    %s16 = scalar_lea.sflag [#allocation3], 1
    %17 = vsyncpa %s16, 0
    %18 = vsyncpa [#allocation6], 0
    %s19 = scalar_lea.sflag [#allocation6], 1
    %20 = vsyncpa %s19, 0
    %21 = vsyncpa [#allocation4], 0
    %s22 = scalar_lea.sflag [#allocation4], 1
    %23 = vsyncpa %s22, 0
    loop: start=0, step=1, limit=4
    $region2: #{tpu_custom_call.1} parent=1 // loop_pre_header
      _
    $region3: #{tpu_custom_call.1} parent=1 // loop_header
      %s25 = sphi 0, %s29
      %p26 = scmp.ge.s32.totalorder %s25, 4
      %s35 = sphi 0, %s37
      %s38 = sphi 0, %s35
      %s39 = sphi 0, %s38
      %s55 = sphi 0, %s39
      %s61 = sphi 0, %s63
      %s64 = sphi 0, %s61
      %s65 = sphi 0, %s64
      %s81 = sphi 0, %s65
      %s85 = sphi 0, %s85
      %s87 = sphi 0, %s85
      %s88 = sphi 0, %s87
      %s102 = sphi 0, %s88
      %s106 = sphi 0, %s106
      %s108 = sphi 0, %s106
      %s109 = sphi 0, %s108
      %s123 = sphi 0, %s109
      %s127 = sphi 0, %s127
      %s129 = sphi 0, %s127
      %s130 = sphi 0, %s129
      %s144 = sphi 0, %s130
      %s148 = sphi 0, %s148
      %s150 = sphi 0, %s148
      %s151 = sphi 0, %s150
      %s165 = sphi 0, %s151
      %s169 = sphi 0, %s169
      %s171 = sphi 0, %s169
      %s172 = sphi 0, %s171
      %s186 = sphi 0, %s172
      %s190 = sphi 0, %s190
      %s192 = sphi 0, %s190
      %s193 = sphi 0, %s192
      %s207 = sphi 0, %s193
      %s211 = sphi 0, %s211
      %s213 = sphi 0, %s211
      %s214 = sphi 0, %s213
      %s228 = sphi 0, %s214
      %s232 = sphi 0, %s232
      %s234 = sphi 0, %s232
      %s235 = sphi 0, %s234
      %s249 = sphi 0, %s235
      %s255 = sphi 0, %s257
      %s258 = sphi 0, %s255
      %s259 = sphi 0, %s258
      %s275 = sphi 0, %s259
    $region4: #{tpu_custom_call.1} parent=1 // loop_header_branch
      %28 = sbr.rel (%p26) target = $region8
    $region5: #{tpu_custom_call.1} parent=1 // loop_body
      %s30 = ssub.s32 %s25, 1
      %s31 = ssub.s32 %s25, 2
      %s32 = sadd.s32 %s25, 1
      %s33 = ssub.s32 %s25, %s32
      %p34 = scmp.eq.s32.totalorder %s33, 0
      %s36 = sadd.s32 %s35, 1
      %s37 = scalar_select %p34, %s35, %s36
      %p40 = pneg %p34
      %p41 = scmp.eq.s32.totalorder %s25, 1
      %p42 = por %p40, %p41
      %p43 = scmp.ne.s32.totalorder %s35, %s38
      %p44 = scmp.eq.s32.totalorder %s25, 0
      %p45 = por %p43, %p44
      %p46 = scmp.ne.s32.totalorder %s35, %s38
      %p47 = scmp.eq.s32.totalorder %s30, 1
      %p48 = por %p46, %p47
      %p49 = scmp.ne.s32.totalorder %s38, %s39
      %p50 = scmp.eq.s32.totalorder %s30, 0
      %p51 = por %p49, %p50
      %p52 = scmp.ne.s32.totalorder %s38, %s39
      %p53 = scmp.eq.s32.totalorder %s31, 1
      %p54 = por %p52, %p53
      %p56 = scmp.ne.s32.totalorder %s39, %s55
      %p57 = scmp.eq.s32.totalorder %s31, 0
      %p58 = por %p56, %p57
      %s59 = ssub.s32 %s25, %s32
      %p60 = scmp.eq.s32.totalorder %s59, 0
      %s62 = sadd.s32 %s61, 1
      %s63 = scalar_select %p60, %s61, %s62
      %p66 = pneg %p60
      %p67 = scmp.eq.s32.totalorder %s25, 1
      %p68 = por %p66, %p67
      %p69 = scmp.ne.s32.totalorder %s61, %s64
      %p70 = scmp.eq.s32.totalorder %s25, 0
      %p71 = por %p69, %p70
      %p72 = scmp.ne.s32.totalorder %s61, %s64
      %p73 = scmp.eq.s32.totalorder %s30, 1
      %p74 = por %p72, %p73
      %p75 = scmp.ne.s32.totalorder %s64, %s65
      %p76 = scmp.eq.s32.totalorder %s30, 0
      %p77 = por %p75, %p76
      %p78 = scmp.ne.s32.totalorder %s64, %s65
      %p79 = scmp.eq.s32.totalorder %s31, 1
      %p80 = por %p78, %p79
      %p82 = scmp.ne.s32.totalorder %s65, %s81
      %p83 = scmp.eq.s32.totalorder %s31, 0
      %p84 = por %p82, %p83
      %s86 = sadd.s32 %s85, 1
      %p89 = scmp.eq.s32.totalorder %s25, 1
      %p90 = scmp.ne.s32.totalorder %s85, %s87
      %p91 = scmp.eq.s32.totalorder %s25, 0
      %p92 = por %p90, %p91
      %p93 = scmp.ne.s32.totalorder %s85, %s87
      %p94 = scmp.eq.s32.totalorder %s30, 1
      %p95 = por %p93, %p94
      %p96 = scmp.ne.s32.totalorder %s87, %s88
      %p97 = scmp.eq.s32.totalorder %s30, 0
      %p98 = por %p96, %p97
      %p99 = scmp.ne.s32.totalorder %s87, %s88
      %p100 = scmp.eq.s32.totalorder %s31, 1
      %p101 = por %p99, %p100
      %p103 = scmp.ne.s32.totalorder %s88, %s102
      %p104 = scmp.eq.s32.totalorder %s31, 0
      %p105 = por %p103, %p104
      %s107 = sadd.s32 %s106, 1
      %p110 = scmp.eq.s32.totalorder %s25, 1
      %p111 = scmp.ne.s32.totalorder %s106, %s108
      %p112 = scmp.eq.s32.totalorder %s25, 0
      %p113 = por %p111, %p112
      %p114 = scmp.ne.s32.totalorder %s106, %s108
      %p115 = scmp.eq.s32.totalorder %s30, 1
      %p116 = por %p114, %p115
      %p117 = scmp.ne.s32.totalorder %s108, %s109
      %p118 = scmp.eq.s32.totalorder %s30, 0
      %p119 = por %p117, %p118
      %p120 = scmp.ne.s32.totalorder %s108, %s109
      %p121 = scmp.eq.s32.totalorder %s31, 1
      %p122 = por %p120, %p121
      %p124 = scmp.ne.s32.totalorder %s109, %s123
      %p125 = scmp.eq.s32.totalorder %s31, 0
      %p126 = por %p124, %p125
      %s128 = sadd.s32 %s127, 1
      %p131 = scmp.eq.s32.totalorder %s25, 1
      %p132 = scmp.ne.s32.totalorder %s127, %s129
      %p133 = scmp.eq.s32.totalorder %s25, 0
      %p134 = por %p132, %p133
      %p135 = scmp.ne.s32.totalorder %s127, %s129
      %p136 = scmp.eq.s32.totalorder %s30, 1
      %p137 = por %p135, %p136
      %p138 = scmp.ne.s32.totalorder %s129, %s130
      %p139 = scmp.eq.s32.totalorder %s30, 0
      %p140 = por %p138, %p139
      %p141 = scmp.ne.s32.totalorder %s129, %s130
      %p142 = scmp.eq.s32.totalorder %s31, 1
      %p143 = por %p141, %p142
      %p145 = scmp.ne.s32.totalorder %s130, %s144
      %p146 = scmp.eq.s32.totalorder %s31, 0
      %p147 = por %p145, %p146
      %s149 = sadd.s32 %s148, 1
      %p152 = scmp.eq.s32.totalorder %s25, 1
      %p153 = scmp.ne.s32.totalorder %s148, %s150
      %p154 = scmp.eq.s32.totalorder %s25, 0
      %p155 = por %p153, %p154
      %p156 = scmp.ne.s32.totalorder %s148, %s150
      %p157 = scmp.eq.s32.totalorder %s30, 1
      %p158 = por %p156, %p157
      %p159 = scmp.ne.s32.totalorder %s150, %s151
      %p160 = scmp.eq.s32.totalorder %s30, 0
      %p161 = por %p159, %p160
      %p162 = scmp.ne.s32.totalorder %s150, %s151
      %p163 = scmp.eq.s32.totalorder %s31, 1
      %p164 = por %p162, %p163
      %p166 = scmp.ne.s32.totalorder %s151, %s165
      %p167 = scmp.eq.s32.totalorder %s31, 0
      %p168 = por %p166, %p167
      %s170 = sadd.s32 %s169, 1
      %p173 = scmp.eq.s32.totalorder %s25, 1
      %p174 = scmp.ne.s32.totalorder %s169, %s171
      %p175 = scmp.eq.s32.totalorder %s25, 0
      %p176 = por %p174, %p175
      %p177 = scmp.ne.s32.totalorder %s169, %s171
      %p178 = scmp.eq.s32.totalorder %s30, 1
      %p179 = por %p177, %p178
      %p180 = scmp.ne.s32.totalorder %s171, %s172
      %p181 = scmp.eq.s32.totalorder %s30, 0
      %p182 = por %p180, %p181
      %p183 = scmp.ne.s32.totalorder %s171, %s172
      %p184 = scmp.eq.s32.totalorder %s31, 1
      %p185 = por %p183, %p184
      %p187 = scmp.ne.s32.totalorder %s172, %s186
      %p188 = scmp.eq.s32.totalorder %s31, 0
      %p189 = por %p187, %p188
      %s191 = sadd.s32 %s190, 1
      %p194 = scmp.eq.s32.totalorder %s25, 1
      %p195 = scmp.ne.s32.totalorder %s190, %s192
      %p196 = scmp.eq.s32.totalorder %s25, 0
      %p197 = por %p195, %p196
      %p198 = scmp.ne.s32.totalorder %s190, %s192
      %p199 = scmp.eq.s32.totalorder %s30, 1
      %p200 = por %p198, %p199
      %p201 = scmp.ne.s32.totalorder %s192, %s193
      %p202 = scmp.eq.s32.totalorder %s30, 0
      %p203 = por %p201, %p202
      %p204 = scmp.ne.s32.totalorder %s192, %s193
      %p205 = scmp.eq.s32.totalorder %s31, 1
      %p206 = por %p204, %p205
      %p208 = scmp.ne.s32.totalorder %s193, %s207
      %p209 = scmp.eq.s32.totalorder %s31, 0
      %p210 = por %p208, %p209
      %s212 = sadd.s32 %s211, 1
      %p215 = scmp.eq.s32.totalorder %s25, 1
      %p216 = scmp.ne.s32.totalorder %s211, %s213
      %p217 = scmp.eq.s32.totalorder %s25, 0
      %p218 = por %p216, %p217
      %p219 = scmp.ne.s32.totalorder %s211, %s213
      %p220 = scmp.eq.s32.totalorder %s30, 1
      %p221 = por %p219, %p220
      %p222 = scmp.ne.s32.totalorder %s213, %s214
      %p223 = scmp.eq.s32.totalorder %s30, 0
      %p224 = por %p222, %p223
      %p225 = scmp.ne.s32.totalorder %s213, %s214
      %p226 = scmp.eq.s32.totalorder %s31, 1
      %p227 = por %p225, %p226
      %p229 = scmp.ne.s32.totalorder %s214, %s228
      %p230 = scmp.eq.s32.totalorder %s31, 0
      %p231 = por %p229, %p230
      %s233 = sadd.s32 %s232, 1
      %p236 = scmp.eq.s32.totalorder %s25, 1
      %p237 = scmp.ne.s32.totalorder %s232, %s234
      %p238 = scmp.eq.s32.totalorder %s25, 0
      %p239 = por %p237, %p238
      %p240 = scmp.ne.s32.totalorder %s232, %s234
      %p241 = scmp.eq.s32.totalorder %s30, 1
      %p242 = por %p240, %p241
      %p243 = scmp.ne.s32.totalorder %s234, %s235
      %p244 = scmp.eq.s32.totalorder %s30, 0
      %p245 = por %p243, %p244
      %p246 = scmp.ne.s32.totalorder %s234, %s235
      %p247 = scmp.eq.s32.totalorder %s31, 1
      %p248 = por %p246, %p247
      %p250 = scmp.ne.s32.totalorder %s235, %s249
      %p251 = scmp.eq.s32.totalorder %s31, 0
      %p252 = por %p250, %p251
      %s253 = ssub.s32 %s25, %s32
      %p254 = scmp.eq.s32.totalorder %s253, 0
      %s256 = sadd.s32 %s255, 1
      %s257 = scalar_select %p254, %s255, %s256
      %p260 = pneg %p254
      %p261 = scmp.eq.s32.totalorder %s25, 1
      %p262 = por %p260, %p261
      %p263 = scmp.ne.s32.totalorder %s255, %s258
      %p264 = scmp.eq.s32.totalorder %s25, 0
      %p265 = por %p263, %p264
      %p266 = scmp.ne.s32.totalorder %s255, %s258
      %p267 = scmp.eq.s32.totalorder %s30, 1
      %p268 = por %p266, %p267
      %p269 = scmp.ne.s32.totalorder %s258, %s259
      %p270 = scmp.eq.s32.totalorder %s30, 0
      %p271 = por %p269, %p270
      %p272 = scmp.ne.s32.totalorder %s258, %s259
      %p273 = scmp.eq.s32.totalorder %s31, 1
      %p274 = por %p272, %p273
      %p276 = scmp.ne.s32.totalorder %s259, %s275
      %p277 = scmp.eq.s32.totalorder %s31, 0
      %p278 = por %p276, %p277
      %p279 = scmp.le.s32.totalorder 1, %s25
      %p280 = scmp.lt.s32.totalorder %s25, 3
      %p281 = pnand %p279, %p280
      %p282 = pneg %p281
      // Predicated region
      $region9: #{tpu_custom_call.1} parent=5 // pred_check
        _
      $region10: #{tpu_custom_call.1} parent=5 // pred_check_branch
        %284 = sbr.rel (%p281) target = $region12
      $region11: #{tpu_custom_call.1} parent=5 // pred_region
        %s285 = ssub.s32 %s25, 1
        // Predicated region
        $region13: #{tpu_custom_call.1} parent=11 // pred_check
          %p286 = pneg %p98
        $region14: #{tpu_custom_call.1} parent=11 // pred_check_branch
          %288 = sbr.rel (%p286) target = $region16
        $region15: #{tpu_custom_call.1} parent=11 // pred_region
          _
        $region16: #{tpu_custom_call.1} parent=11 // pred_fallthru
          _
        // Predicated region
        $region17: #{tpu_custom_call.1} parent=11 // pred_check
          %p289 = pneg %p119
        $region18: #{tpu_custom_call.1} parent=11 // pred_check_branch
          %291 = sbr.rel (%p289) target = $region20
        $region19: #{tpu_custom_call.1} parent=11 // pred_region
          _
        $region20: #{tpu_custom_call.1} parent=11 // pred_fallthru
          _
        // Predicated region
        $region21: #{tpu_custom_call.1} parent=11 // pred_check
          %p292 = pneg %p140
        $region22: #{tpu_custom_call.1} parent=11 // pred_check_branch
          %294 = sbr.rel (%p292) target = $region24
        $region23: #{tpu_custom_call.1} parent=11 // pred_region
          _
        $region24: #{tpu_custom_call.1} parent=11 // pred_fallthru
          _
        // Predicated region
        $region25: #{tpu_custom_call.1} parent=11 // pred_check
          %p295 = pneg %p161
        $region26: #{tpu_custom_call.1} parent=11 // pred_check_branch
          %297 = sbr.rel (%p295) target = $region28
        $region27: #{tpu_custom_call.1} parent=11 // pred_region
          _
        $region28: #{tpu_custom_call.1} parent=11 // pred_fallthru
          _
        // Predicated region
        $region29: #{tpu_custom_call.1} parent=11 // pred_check
          %p298 = pneg %p182
        $region30: #{tpu_custom_call.1} parent=11 // pred_check_branch
          %300 = sbr.rel (%p298) target = $region32
        $region31: #{tpu_custom_call.1} parent=11 // pred_region
          _
        $region32: #{tpu_custom_call.1} parent=11 // pred_fallthru
          _
        // Predicated region
        $region33: #{tpu_custom_call.1} parent=11 // pred_check
          %p301 = pneg %p203
        $region34: #{tpu_custom_call.1} parent=11 // pred_check_branch
          %303 = sbr.rel (%p301) target = $region36
        $region35: #{tpu_custom_call.1} parent=11 // pred_region
          _
        $region36: #{tpu_custom_call.1} parent=11 // pred_fallthru
          _
        // Predicated region
        $region37: #{tpu_custom_call.1} parent=11 // pred_check
          %p304 = pneg %p224
        $region38: #{tpu_custom_call.1} parent=11 // pred_check_branch
          %306 = sbr.rel (%p304) target = $region40
        $region39: #{tpu_custom_call.1} parent=11 // pred_region
          _
        $region40: #{tpu_custom_call.1} parent=11 // pred_fallthru
          _
        // Predicated region
        $region41: #{tpu_custom_call.1} parent=11 // pred_check
          %p307 = pneg %p245
        $region42: #{tpu_custom_call.1} parent=11 // pred_check_branch
          %309 = sbr.rel (%p307) target = $region44
        $region43: #{tpu_custom_call.1} parent=11 // pred_region
          _
        $region44: #{tpu_custom_call.1} parent=11 // pred_fallthru
          _
      $region12: #{tpu_custom_call.1} parent=5 // pred_fallthru
        _
      %p310 = scmp.lt.s32.totalorder %s25, 2
      // Predicated region
      $region45: #{tpu_custom_call.1} parent=5 // pred_check
        %p311 = pneg %p310
      $region46: #{tpu_custom_call.1} parent=5 // pred_check_branch
        %313 = sbr.rel (%p311) target = $region48
      $region47: #{tpu_custom_call.1} parent=5 // pred_region
        // Predicated region
        $region49: #{tpu_custom_call.1} parent=47 // pred_check
          %p314 = pneg %p45
        $region50: #{tpu_custom_call.1} parent=47 // pred_check_branch
          %316 = sbr.rel (%p314) target = $region52
        $region51: #{tpu_custom_call.1} parent=47 // pred_region
          %s317 = sand.u32 %s35, 1
          %s318 = scalar_lea.sflag [#allocation3], %s317
          %s319 = sand.u32 %s35, 1
          %s320 = smul.addr %s319, 64
          %s321 = scalar_lea.vmem [#allocation2], %s320
          %323 = vsyncadd %s318, 0
          %s324 = smul.addr %s25, 8
          %s325 = smul.addr %s324, 8
          %s326 = scalar_lea.hbm %s0, %s325
          %s328 = sshll.u32 %s326, 4
          %s329 = int_to_ptr.hbm [resolvable:$true] %s328
          %s330 = sshll.u32 %s321, 4
          %s331 = int_to_ptr.vmem [resolvable:$true] %s330
          %333 = dma.hbm_to_vmem [thread:$0]  %s329, 1024, %s331, %s318
        $region52: #{tpu_custom_call.1} parent=47 // pred_fallthru
          _
        // Predicated region
        $region53: #{tpu_custom_call.1} parent=47 // pred_check
          %p334 = pneg %p71
        $region54: #{tpu_custom_call.1} parent=47 // pred_check_branch
          %336 = sbr.rel (%p334) target = $region56
        $region55: #{tpu_custom_call.1} parent=47 // pred_region
          %s337 = sand.u32 %s61, 1
          %s338 = scalar_lea.sflag [#allocation6], %s337
          %s339 = sand.u32 %s61, 1
          %s340 = smul.addr %s339, 64
          %s341 = scalar_lea.vmem [#allocation5], %s340
          %343 = vsyncadd %s338, 0
          %s344 = smul.addr %s25, 8
          %s345 = smul.addr %s344, 8
          %s346 = scalar_lea.hbm %s1, %s345
          %s348 = sshll.u32 %s346, 4
          %s349 = int_to_ptr.hbm [resolvable:$true] %s348
          %s350 = sshll.u32 %s341, 4
          %s351 = int_to_ptr.vmem [resolvable:$true] %s350
          %353 = dma.hbm_to_vmem [thread:$0]  %s349, 1024, %s351, %s338
        $region56: #{tpu_custom_call.1} parent=47 // pred_fallthru
          _
      $region48: #{tpu_custom_call.1} parent=5 // pred_fallthru
        _
      %p354 = scmp.le.s32.totalorder 1, %s25
      %p355 = scmp.lt.s32.totalorder %s25, 3
      %p356 = pnand %p354, %p355
      %p357 = pneg %p356
      // Predicated region
      $region57: #{tpu_custom_call.1} parent=5 // pred_check
        _
      $region58: #{tpu_custom_call.1} parent=5 // pred_check_branch
        %359 = sbr.rel (%p356) target = $region60
      $region59: #{tpu_custom_call.1} parent=5 // pred_region
        %s360 = ssub.s32 %s25, 1
        %s361 = sand.u32 %s38, 1
        %s362 = scalar_lea.sflag [#allocation3], %s361
        %s363 = sand.u32 %s38, 1
        %s364 = smul.addr %s363, 64
        %s365 = scalar_lea.vmem [#allocation2], %s364
        // Predicated region
        $region61: #{tpu_custom_call.1} parent=59 // pred_check
          %p366 = pneg %p51
        $region62: #{tpu_custom_call.1} parent=59 // pred_check_branch
          %368 = sbr.rel (%p366) target = $region64
        $region63: #{tpu_custom_call.1} parent=59 // pred_region
          %370 = dma.done %s362, 1024
        $region64: #{tpu_custom_call.1} parent=59 // pred_fallthru
          _
        %s371 = sand.u32 %s64, 1
        %s372 = scalar_lea.sflag [#allocation6], %s371
        %s373 = sand.u32 %s64, 1
        %s374 = smul.addr %s373, 64
        %s375 = scalar_lea.vmem [#allocation5], %s374
        // Predicated region
        $region65: #{tpu_custom_call.1} parent=59 // pred_check
          %p376 = pneg %p77
        $region66: #{tpu_custom_call.1} parent=59 // pred_check_branch
          %378 = sbr.rel (%p376) target = $region68
        $region67: #{tpu_custom_call.1} parent=59 // pred_region
          %380 = dma.done %s372, 1024
        $region68: #{tpu_custom_call.1} parent=59 // pred_fallthru
          _
        %s381 = sand.u32 %s38, 1
        %s382 = scalar_lea.sflag [#allocation3], %s381
        %s383 = sand.u32 %s38, 1
        %s384 = smul.addr %s383, 64
        %s385 = scalar_lea.vmem [#allocation2], %s384
        %p386 = pneg %p51
        %p387 = pneg %p48
        %s388 = sand.u32 %s64, 1
        %s389 = scalar_lea.sflag [#allocation6], %s388
        %s390 = sand.u32 %s64, 1
        %s391 = smul.addr %s390, 64
        %s392 = scalar_lea.vmem [#allocation5], %s391
        %p393 = pneg %p77
        %p394 = pneg %p74
        %p395 = pneg %p98
        %p396 = pneg %p95
        %p397 = pneg %p119
        %p398 = pneg %p116
        %p399 = pneg %p140
        %p400 = pneg %p137
        %p401 = pneg %p161
        %p402 = pneg %p158
        %p403 = pneg %p182
        %p404 = pneg %p179
        %p405 = pneg %p203
        %p406 = pneg %p200
        %p407 = pneg %p224
        %p408 = pneg %p221
        %p409 = pneg %p245
        %p410 = pneg %p242
        %p411 = pneg %p271
        %p412 = pneg %p268
        %s413 = sand.u32 %s258, 1
        %s414 = scalar_lea.sflag [#allocation4], %s413
        %s415 = sand.u32 %s258, 1
        %s416 = smul.addr %s415, 64
        %s417 = scalar_lea.vmem [#allocation7], %s416
        %v418 = vlaneseq
        %v419 = vand.u32 %v418, 127
        %v420 = vadd.s32 %v419, 128
        %v421 = vadd.s32 %v419, 256
        %v422 = vadd.s32 %v419, 384
        %v423 = vadd.s32 %v419, 512
        %v424 = vadd.s32 %v419, 640
        %v425 = vadd.s32 %v419, 768
        %v426 = vadd.s32 %v419, 896
        %vm427 = vcmp.lt.s32.totalorder %v419, 0
        %v428 = vsub.s32 0, %v419
        %v429 = vsel %vm427, %v428, %v419
        %v430 = vshrl.u32 %v429, 5
        %v431 = vand.u32 %v429, 31
        %v432 = vsub.s32 0, %v431
        %v433 = vsel %vm427, %v432, %v431
        %vm434 = vcmp.lt.s32.totalorder %v420, 0
        %v435 = vsub.s32 0, %v420
        %v436 = vsel %vm434, %v435, %v420
        %v437 = vshrl.u32 %v436, 5
        %v438 = vand.u32 %v436, 31
        %v439 = vsub.s32 0, %v438
        %v440 = vsel %vm434, %v439, %v438
        %vm441 = vcmp.lt.s32.totalorder %v421, 0
        %v442 = vsub.s32 0, %v421
        %v443 = vsel %vm441, %v442, %v421
        %v444 = vshrl.u32 %v443, 5
        %v445 = vand.u32 %v443, 31
        %v446 = vsub.s32 0, %v445
        %v447 = vsel %vm441, %v446, %v445
        %vm448 = vcmp.lt.s32.totalorder %v422, 0
        %v449 = vsub.s32 0, %v422
        %v450 = vsel %vm448, %v449, %v422
        %v451 = vshrl.u32 %v450, 5
        %v452 = vand.u32 %v450, 31
        %v453 = vsub.s32 0, %v452
        %v454 = vsel %vm448, %v453, %v452
        %vm455 = vcmp.lt.s32.totalorder %v423, 0
        %v456 = vsub.s32 0, %v423
        %v457 = vsel %vm455, %v456, %v423
        %v458 = vshrl.u32 %v457, 5
        %v459 = vand.u32 %v457, 31
        %v460 = vsub.s32 0, %v459
        %v461 = vsel %vm455, %v460, %v459
        %vm462 = vcmp.lt.s32.totalorder %v424, 0
        %v463 = vsub.s32 0, %v424
        %v464 = vsel %vm462, %v463, %v424
        %v465 = vshrl.u32 %v464, 5
        %v466 = vand.u32 %v464, 31
        %v467 = vsub.s32 0, %v466
        %v468 = vsel %vm462, %v467, %v466
        %vm469 = vcmp.lt.s32.totalorder %v425, 0
        %v470 = vsub.s32 0, %v425
        %v471 = vsel %vm469, %v470, %v425
        %v472 = vshrl.u32 %v471, 5
        %v473 = vand.u32 %v471, 31
        %v474 = vsub.s32 0, %v473
        %v475 = vsel %vm469, %v474, %v473
        %vm476 = vcmp.lt.s32.totalorder %v426, 0
        %v477 = vsub.s32 0, %v426
        %v478 = vsel %vm476, %v477, %v426
        %v479 = vshrl.u32 %v478, 5
        %v480 = vand.u32 %v478, 31
        %v481 = vsub.s32 0, %v480
        %v482 = vsel %vm476, %v481, %v480
        %vm483 = vcmp.ne.s32.totalorder %v433, 0
        %vm484 = vcmp.ne.s32.totalorder %v440, 0
        %vm485 = vcmp.ne.s32.totalorder %v447, 0
        %vm486 = vcmp.ne.s32.totalorder %v454, 0
        %vm487 = vcmp.ne.s32.totalorder %v461, 0
        %vm488 = vcmp.ne.s32.totalorder %v468, 0
        %vm489 = vcmp.ne.s32.totalorder %v475, 0
        %vm490 = vcmp.ne.s32.totalorder %v482, 0
        %vm491 = vcmp.lt.s32.totalorder %v433, 0
        %vm492 = vcmp.lt.s32.totalorder %v440, 0
        %vm493 = vcmp.lt.s32.totalorder %v447, 0
        %vm494 = vcmp.lt.s32.totalorder %v454, 0
        %vm495 = vcmp.lt.s32.totalorder %v461, 0
        %vm496 = vcmp.lt.s32.totalorder %v468, 0
        %vm497 = vcmp.lt.s32.totalorder %v475, 0
        %vm498 = vcmp.lt.s32.totalorder %v482, 0
        %vm499 = vmand %vm491, %vm483
        %vm500 = vmand %vm492, %vm484
        %vm501 = vmand %vm493, %vm485
        %vm502 = vmand %vm494, %vm486
        %vm503 = vmand %vm495, %vm487
        %vm504 = vmand %vm496, %vm488
        %vm505 = vmand %vm497, %vm489
        %vm506 = vmand %vm498, %vm490
        %v507 = vadd.s32 %v433, 32
        %v508 = vadd.s32 %v440, 32
        %v509 = vadd.s32 %v447, 32
        %v510 = vadd.s32 %v454, 32
        %v511 = vadd.s32 %v461, 32
        %v512 = vadd.s32 %v468, 32
        %v513 = vadd.s32 %v475, 32
        %v514 = vadd.s32 %v482, 32
        %v515 = vsel %vm499, %v507, %v433
        %v516 = vsel %vm500, %v508, %v440
        %v517 = vsel %vm501, %v509, %v447
        %v518 = vsel %vm502, %v510, %v454
        %v519 = vsel %vm503, %v511, %v461
        %v520 = vsel %vm504, %v512, %v468
        %v521 = vsel %vm505, %v513, %v475
        %v522 = vsel %vm506, %v514, %v482
        %v523 = vld [vmem:[%s365] sm:$0xff]
        %v524 = vld [vmem:[%s365 + $0x8] sm:$0xff]
        %v525 = vld [vmem:[%s365 + $0x10] sm:$0xff]
        %v526 = vld [vmem:[%s365 + $0x18] sm:$0xff]
        %v527 = vld [vmem:[%s365 + $0x20] sm:$0xff]
        %v528 = vld [vmem:[%s365 + $0x28] sm:$0xff]
        %v529 = vld [vmem:[%s365 + $0x30] sm:$0xff]
        %v530 = vld [vmem:[%s365 + $0x38] sm:$0xff]
        %539 = vrot.lane.b32.xlu0 %v523, 32
        %v540 = vpop.permute.xlu0 %539
        %541 = vrot.lane.b32.xlu0 %v524, 32
        %v542 = vpop.permute.xlu0 %541
        %543 = vrot.lane.b32.xlu0 %v525, 32
        %v544 = vpop.permute.xlu0 %543
        %545 = vrot.lane.b32.xlu0 %v526, 32
        %v546 = vpop.permute.xlu0 %545
        %547 = vrot.lane.b32.xlu0 %v527, 32
        %v548 = vpop.permute.xlu0 %547
        %549 = vrot.lane.b32.xlu0 %v528, 32
        %v550 = vpop.permute.xlu0 %549
        %551 = vrot.lane.b32.xlu0 %v529, 32
        %v552 = vpop.permute.xlu0 %551
        %553 = vrot.lane.b32.xlu0 %v530, 32
        %v554 = vpop.permute.xlu0 %553
        %vm555 = vcmask 261120
        %v556 = vsel %vm555, %v540, %v542
        %v557 = vsel %vm555, %v542, %v544
        %v558 = vsel %vm555, %v544, %v546
        %v559 = vsel %vm555, %v546, %v548
        %v560 = vsel %vm555, %v548, %v550
        %v561 = vsel %vm555, %v550, %v552
        %v562 = vsel %vm555, %v552, %v554
        %v571 = vsel %vm555, 0.0, %v540
        %572 = vrot.lane.b32.xlu0 %v523, 64
        %v573 = vpop.permute.xlu0 %572
        %574 = vrot.lane.b32.xlu0 %v524, 64
        %v575 = vpop.permute.xlu0 %574
        %576 = vrot.lane.b32.xlu0 %v525, 64
        %v577 = vpop.permute.xlu0 %576
        %578 = vrot.lane.b32.xlu0 %v526, 64
        %v579 = vpop.permute.xlu0 %578
        %580 = vrot.lane.b32.xlu0 %v527, 64
        %v581 = vpop.permute.xlu0 %580
        %582 = vrot.lane.b32.xlu0 %v528, 64
        %v583 = vpop.permute.xlu0 %582
        %584 = vrot.lane.b32.xlu0 %v529, 64
        %v585 = vpop.permute.xlu0 %584
        %586 = vrot.lane.b32.xlu0 %v530, 64
        %v587 = vpop.permute.xlu0 %586
        %vm588 = vcmask 523264
        %v589 = vsel %vm588, %v573, %v575
        %v590 = vsel %vm588, %v575, %v577
        %v591 = vsel %vm588, %v577, %v579
        %v592 = vsel %vm588, %v579, %v581
        %v593 = vsel %vm588, %v581, %v583
        %v594 = vsel %vm588, %v583, %v585
        %v595 = vsel %vm588, %v585, %v587
        %v604 = vsel %vm588, 0.0, %v573
        %v605 = vmul.f32 %v604, 0.25
        %v606 = vmul.f32 %v589, 0.25
        %v607 = vmul.f32 %v590, 0.25
        %v608 = vmul.f32 %v591, 0.25
        %v609 = vmul.f32 %v592, 0.25
        %v610 = vmul.f32 %v593, 0.25
        %v611 = vmul.f32 %v594, 0.25
        %v612 = vmul.f32 %v595, 0.25
        %v613 = vmul.f32 %v571, 0.75
        %v614 = vmul.f32 %v556, 0.75
        %v615 = vmul.f32 %v557, 0.75
        %v616 = vmul.f32 %v558, 0.75
        %v617 = vmul.f32 %v559, 0.75
        %v618 = vmul.f32 %v560, 0.75
        %v619 = vmul.f32 %v561, 0.75
        %v620 = vmul.f32 %v562, 0.75
        %v621 = vadd.f32 %v605, %v613
        %v622 = vadd.f32 %v606, %v614
        %v623 = vadd.f32 %v607, %v615
        %v624 = vadd.f32 %v608, %v616
        %v625 = vadd.f32 %v609, %v617
        %v626 = vadd.f32 %v610, %v618
        %v627 = vadd.f32 %v611, %v619
        %v628 = vadd.f32 %v612, %v620
        %v629 = vmul.f32 %v523, 0.75
        %v630 = vmul.f32 %v524, 0.75
        %v631 = vmul.f32 %v525, 0.75
        %v632 = vmul.f32 %v526, 0.75
        %v633 = vmul.f32 %v527, 0.75
        %v634 = vmul.f32 %v528, 0.75
        %v635 = vmul.f32 %v529, 0.75
        %v636 = vmul.f32 %v530, 0.75
        %v637 = vadd.f32 %v621, %v629
        %v638 = vadd.f32 %v622, %v630
        %v639 = vadd.f32 %v623, %v631
        %v640 = vadd.f32 %v624, %v632
        %v641 = vadd.f32 %v625, %v633
        %v642 = vadd.f32 %v626, %v634
        %v643 = vadd.f32 %v627, %v635
        %v644 = vadd.f32 %v628, %v636
        %645 = vrot.lane.b32.xlu0 %v523, 96
        %v646 = vpop.permute.xlu0 %645
        %647 = vrot.lane.b32.xlu0 %v524, 96
        %v648 = vpop.permute.xlu0 %647
        %649 = vrot.lane.b32.xlu0 %v525, 96
        %v650 = vpop.permute.xlu0 %649
        %651 = vrot.lane.b32.xlu0 %v526, 96
        %v652 = vpop.permute.xlu0 %651
        %653 = vrot.lane.b32.xlu0 %v527, 96
        %v654 = vpop.permute.xlu0 %653
        %655 = vrot.lane.b32.xlu0 %v528, 96
        %v656 = vpop.permute.xlu0 %655
        %657 = vrot.lane.b32.xlu0 %v529, 96
        %v658 = vpop.permute.xlu0 %657
        %659 = vrot.lane.b32.xlu0 %v530, 96
        %v660 = vpop.permute.xlu0 %659
        %vm661 = vcmask 785408
        %v662 = vsel %vm661, %v646, %v648
        %v663 = vsel %vm661, %v648, %v650
        %v664 = vsel %vm661, %v650, %v652
        %v665 = vsel %vm661, %v652, %v654
        %v666 = vsel %vm661, %v654, %v656
        %v667 = vsel %vm661, %v656, %v658
        %v668 = vsel %vm661, %v658, %v660
        %v677 = vsel %vm661, %v660, 0.0
        %v678 = vmul.f32 %v662, 0.25
        %v679 = vmul.f32 %v663, 0.25
        %v680 = vmul.f32 %v664, 0.25
        %v681 = vmul.f32 %v665, 0.25
        %v682 = vmul.f32 %v666, 0.25
        %v683 = vmul.f32 %v667, 0.25
        %v684 = vmul.f32 %v668, 0.25
        %v685 = vmul.f32 %v677, 0.25
        %v686 = vadd.f32 %v637, %v678
        %v687 = vadd.f32 %v638, %v679
        %v688 = vadd.f32 %v639, %v680
        %v689 = vadd.f32 %v640, %v681
        %v690 = vadd.f32 %v641, %v682
        %v691 = vadd.f32 %v642, %v683
        %v692 = vadd.f32 %v643, %v684
        %v693 = vadd.f32 %v644, %v685
        %vm694 = vcmp.lt.s32.totalorder %v419, 32
        %vm695 = vcmp.lt.s32.totalorder %v420, 32
        %vm696 = vcmp.lt.s32.totalorder %v421, 32
        %vm697 = vcmp.lt.s32.totalorder %v422, 32
        %vm698 = vcmp.lt.s32.totalorder %v423, 32
        %vm699 = vcmp.lt.s32.totalorder %v424, 32
        %vm700 = vcmp.lt.s32.totalorder %v425, 32
        %vm701 = vcmp.lt.s32.totalorder %v426, 32
        %v702 = vmul.f32 %v523, 0.25
        %v703 = vmul.f32 %v524, 0.25
        %v704 = vmul.f32 %v525, 0.25
        %v705 = vmul.f32 %v526, 0.25
        %v706 = vmul.f32 %v527, 0.25
        %v707 = vmul.f32 %v528, 0.25
        %v708 = vmul.f32 %v529, 0.25
        %v709 = vmul.f32 %v530, 0.25
        %v710 = vsel %vm694, 1, 0
        %v711 = vsel %vm695, 1, 0
        %v712 = vsel %vm696, 1, 0
        %v713 = vsel %vm697, 1, 0
        %v714 = vsel %vm698, 1, 0
        %v715 = vsel %vm699, 1, 0
        %v716 = vsel %vm700, 1, 0
        %v717 = vsel %vm701, 1, 0
        %vm718 = vcmp.eq.s32.totalorder %v710, 1
        %vm719 = vcmp.eq.s32.totalorder %v711, 1
        %vm720 = vcmp.eq.s32.totalorder %v712, 1
        %vm721 = vcmp.eq.s32.totalorder %v713, 1
        %vm722 = vcmp.eq.s32.totalorder %v714, 1
        %vm723 = vcmp.eq.s32.totalorder %v715, 1
        %vm724 = vcmp.eq.s32.totalorder %v716, 1
        %vm725 = vcmp.eq.s32.totalorder %v717, 1
        %v726 = vsel %vm718, %v702, 0.0
        %v727 = vsel %vm719, %v703, 0.0
        %v728 = vsel %vm720, %v704, 0.0
        %v729 = vsel %vm721, %v705, 0.0
        %v730 = vsel %vm722, %v706, 0.0
        %v731 = vsel %vm723, %v707, 0.0
        %v732 = vsel %vm724, %v708, 0.0
        %v733 = vsel %vm725, %v709, 0.0
        %v734 = vadd.f32 %v686, %v726
        %v735 = vadd.f32 %v687, %v727
        %v736 = vadd.f32 %v688, %v728
        %v737 = vadd.f32 %v689, %v729
        %v738 = vadd.f32 %v690, %v730
        %v739 = vadd.f32 %v691, %v731
        %v740 = vadd.f32 %v692, %v732
        %v741 = vadd.f32 %v693, %v733
        %vm742 = vcmp.ge.s32.totalorder %v419, 992
        %vm743 = vcmp.ge.s32.totalorder %v420, 992
        %vm744 = vcmp.ge.s32.totalorder %v421, 992
        %vm745 = vcmp.ge.s32.totalorder %v422, 992
        %vm746 = vcmp.ge.s32.totalorder %v423, 992
        %vm747 = vcmp.ge.s32.totalorder %v424, 992
        %vm748 = vcmp.ge.s32.totalorder %v425, 992
        %vm749 = vcmp.ge.s32.totalorder %v426, 992
        %v750 = vmul.f32 %v571, 0.25
        %v751 = vmul.f32 %v556, 0.25
        %v752 = vmul.f32 %v557, 0.25
        %v753 = vmul.f32 %v558, 0.25
        %v754 = vmul.f32 %v559, 0.25
        %v755 = vmul.f32 %v560, 0.25
        %v756 = vmul.f32 %v561, 0.25
        %v757 = vmul.f32 %v562, 0.25
        %v758 = vsel %vm742, 1, 0
        %v759 = vsel %vm743, 1, 0
        %v760 = vsel %vm744, 1, 0
        %v761 = vsel %vm745, 1, 0
        %v762 = vsel %vm746, 1, 0
        %v763 = vsel %vm747, 1, 0
        %v764 = vsel %vm748, 1, 0
        %v765 = vsel %vm749, 1, 0
        %vm766 = vcmp.eq.s32.totalorder %v758, 1
        %vm767 = vcmp.eq.s32.totalorder %v759, 1
        %vm768 = vcmp.eq.s32.totalorder %v760, 1
        %vm769 = vcmp.eq.s32.totalorder %v761, 1
        %vm770 = vcmp.eq.s32.totalorder %v762, 1
        %vm771 = vcmp.eq.s32.totalorder %v763, 1
        %vm772 = vcmp.eq.s32.totalorder %v764, 1
        %vm773 = vcmp.eq.s32.totalorder %v765, 1
        %v774 = vsel %vm766, %v750, 0.0
        %v775 = vsel %vm767, %v751, 0.0
        %v776 = vsel %vm768, %v752, 0.0
        %v777 = vsel %vm769, %v753, 0.0
        %v778 = vsel %vm770, %v754, 0.0
        %v779 = vsel %vm771, %v755, 0.0
        %v780 = vsel %vm772, %v756, 0.0
        %v781 = vsel %vm773, %v757, 0.0
        %v782 = vadd.f32 %v734, %v774
        %v783 = vadd.f32 %v735, %v775
        %v784 = vadd.f32 %v736, %v776
        %v785 = vadd.f32 %v737, %v777
        %v786 = vadd.f32 %v738, %v778
        %v787 = vadd.f32 %v739, %v779
        %v788 = vadd.f32 %v740, %v780
        %v789 = vadd.f32 %v741, %v781
        %798 = vrot.lane.b32.xlu0 %v782, 1
        %v799 = vpop.permute.xlu0 %798
        %800 = vrot.lane.b32.xlu0 %v783, 1
        %v801 = vpop.permute.xlu0 %800
        %802 = vrot.lane.b32.xlu0 %v784, 1
        %v803 = vpop.permute.xlu0 %802
        %804 = vrot.lane.b32.xlu0 %v785, 1
        %v805 = vpop.permute.xlu0 %804
        %806 = vrot.lane.b32.xlu0 %v786, 1
        %v807 = vpop.permute.xlu0 %806
        %808 = vrot.lane.b32.xlu0 %v787, 1
        %v809 = vpop.permute.xlu0 %808
        %810 = vrot.lane.b32.xlu0 %v788, 1
        %v811 = vpop.permute.xlu0 %810
        %812 = vrot.lane.b32.xlu0 %v789, 1
        %v813 = vpop.permute.xlu0 %812
        %vm814 = vcmask 7168
        %v815 = vsel %vm814, %v799, %v801
        %v816 = vsel %vm814, %v801, %v803
        %v817 = vsel %vm814, %v803, %v805
        %v818 = vsel %vm814, %v805, %v807
        %v819 = vsel %vm814, %v807, %v809
        %v820 = vsel %vm814, %v809, %v811
        %v821 = vsel %vm814, %v811, %v813
        %v830 = vsel %vm814, 0.0, %v799
        %vm831 = vcmp.ge.s32.totalorder %v515, 1
        %vm832 = vcmp.ge.s32.totalorder %v516, 1
        %vm833 = vcmp.ge.s32.totalorder %v517, 1
        %vm834 = vcmp.ge.s32.totalorder %v518, 1
        %vm835 = vcmp.ge.s32.totalorder %v519, 1
        %vm836 = vcmp.ge.s32.totalorder %v520, 1
        %vm837 = vcmp.ge.s32.totalorder %v521, 1
        %vm838 = vcmp.ge.s32.totalorder %v522, 1
        %v839 = vsel %vm831, 1, 0
        %v840 = vsel %vm832, 1, 0
        %v841 = vsel %vm833, 1, 0
        %v842 = vsel %vm834, 1, 0
        %v843 = vsel %vm835, 1, 0
        %v844 = vsel %vm836, 1, 0
        %v845 = vsel %vm837, 1, 0
        %v846 = vsel %vm838, 1, 0
        %vm847 = vcmp.eq.s32.totalorder %v839, 1
        %vm848 = vcmp.eq.s32.totalorder %v840, 1
        %vm849 = vcmp.eq.s32.totalorder %v841, 1
        %vm850 = vcmp.eq.s32.totalorder %v842, 1
        %vm851 = vcmp.eq.s32.totalorder %v843, 1
        %vm852 = vcmp.eq.s32.totalorder %v844, 1
        %vm853 = vcmp.eq.s32.totalorder %v845, 1
        %vm854 = vcmp.eq.s32.totalorder %v846, 1
        %v855 = vsel %vm847, %v830, 0.0
        %v856 = vsel %vm848, %v815, 0.0
        %v857 = vsel %vm849, %v816, 0.0
        %v858 = vsel %vm850, %v817, 0.0
        %v859 = vsel %vm851, %v818, 0.0
        %v860 = vsel %vm852, %v819, 0.0
        %v861 = vsel %vm853, %v820, 0.0
        %v862 = vsel %vm854, %v821, 0.0
        %863 = vrot.lane.b32.xlu0 %v782, 2
        %v864 = vpop.permute.xlu0 %863
        %865 = vrot.lane.b32.xlu0 %v783, 2
        %v866 = vpop.permute.xlu0 %865
        %867 = vrot.lane.b32.xlu0 %v784, 2
        %v868 = vpop.permute.xlu0 %867
        %869 = vrot.lane.b32.xlu0 %v785, 2
        %v870 = vpop.permute.xlu0 %869
        %871 = vrot.lane.b32.xlu0 %v786, 2
        %v872 = vpop.permute.xlu0 %871
        %873 = vrot.lane.b32.xlu0 %v787, 2
        %v874 = vpop.permute.xlu0 %873
        %875 = vrot.lane.b32.xlu0 %v788, 2
        %v876 = vpop.permute.xlu0 %875
        %877 = vrot.lane.b32.xlu0 %v789, 2
        %v878 = vpop.permute.xlu0 %877
        %vm879 = vcmask 15360
        %v880 = vsel %vm879, %v864, %v866
        %v881 = vsel %vm879, %v866, %v868
        %v882 = vsel %vm879, %v868, %v870
        %v883 = vsel %vm879, %v870, %v872
        %v884 = vsel %vm879, %v872, %v874
        %v885 = vsel %vm879, %v874, %v876
        %v886 = vsel %vm879, %v876, %v878
        %v895 = vsel %vm879, 0.0, %v864
        %vm896 = vcmp.ge.s32.totalorder %v515, 2
        %vm897 = vcmp.ge.s32.totalorder %v516, 2
        %vm898 = vcmp.ge.s32.totalorder %v517, 2
        %vm899 = vcmp.ge.s32.totalorder %v518, 2
        %vm900 = vcmp.ge.s32.totalorder %v519, 2
        %vm901 = vcmp.ge.s32.totalorder %v520, 2
        %vm902 = vcmp.ge.s32.totalorder %v521, 2
        %vm903 = vcmp.ge.s32.totalorder %v522, 2
        %v904 = vsel %vm896, 1, 0
        %v905 = vsel %vm897, 1, 0
        %v906 = vsel %vm898, 1, 0
        %v907 = vsel %vm899, 1, 0
        %v908 = vsel %vm900, 1, 0
        %v909 = vsel %vm901, 1, 0
        %v910 = vsel %vm902, 1, 0
        %v911 = vsel %vm903, 1, 0
        %vm912 = vcmp.eq.s32.totalorder %v904, 1
        %vm913 = vcmp.eq.s32.totalorder %v905, 1
        %vm914 = vcmp.eq.s32.totalorder %v906, 1
        %vm915 = vcmp.eq.s32.totalorder %v907, 1
        %vm916 = vcmp.eq.s32.totalorder %v908, 1
        %vm917 = vcmp.eq.s32.totalorder %v909, 1
        %vm918 = vcmp.eq.s32.totalorder %v910, 1
        %vm919 = vcmp.eq.s32.totalorder %v911, 1
        %v920 = vsel %vm912, %v895, 0.0
        %v921 = vsel %vm913, %v880, 0.0
        %v922 = vsel %vm914, %v881, 0.0
        %v923 = vsel %vm915, %v882, 0.0
        %v924 = vsel %vm916, %v883, 0.0
        %v925 = vsel %vm917, %v884, 0.0
        %v926 = vsel %vm918, %v885, 0.0
        %v927 = vsel %vm919, %v886, 0.0
        %v928 = vmul.f32 %v920, 0.25
        %v929 = vmul.f32 %v921, 0.25
        %v930 = vmul.f32 %v922, 0.25
        %v931 = vmul.f32 %v923, 0.25
        %v932 = vmul.f32 %v924, 0.25
        %v933 = vmul.f32 %v925, 0.25
        %v934 = vmul.f32 %v926, 0.25
        %v935 = vmul.f32 %v927, 0.25
        %v936 = vmul.f32 %v855, 0.75
        %v937 = vmul.f32 %v856, 0.75
        %v938 = vmul.f32 %v857, 0.75
        %v939 = vmul.f32 %v858, 0.75
        %v940 = vmul.f32 %v859, 0.75
        %v941 = vmul.f32 %v860, 0.75
        %v942 = vmul.f32 %v861, 0.75
        %v943 = vmul.f32 %v862, 0.75
        %v944 = vadd.f32 %v928, %v936
        %v945 = vadd.f32 %v929, %v937
        %v946 = vadd.f32 %v930, %v938
        %v947 = vadd.f32 %v931, %v939
        %v948 = vadd.f32 %v932, %v940
        %v949 = vadd.f32 %v933, %v941
        %v950 = vadd.f32 %v934, %v942
        %v951 = vadd.f32 %v935, %v943
        %v952 = vmul.f32 %v782, 0.75
        %v953 = vmul.f32 %v783, 0.75
        %v954 = vmul.f32 %v784, 0.75
        %v955 = vmul.f32 %v785, 0.75
        %v956 = vmul.f32 %v786, 0.75
        %v957 = vmul.f32 %v787, 0.75
        %v958 = vmul.f32 %v788, 0.75
        %v959 = vmul.f32 %v789, 0.75
        %v960 = vadd.f32 %v944, %v952
        %v961 = vadd.f32 %v945, %v953
        %v962 = vadd.f32 %v946, %v954
        %v963 = vadd.f32 %v947, %v955
        %v964 = vadd.f32 %v948, %v956
        %v965 = vadd.f32 %v949, %v957
        %v966 = vadd.f32 %v950, %v958
        %v967 = vadd.f32 %v951, %v959
        %968 = vrot.lane.b32.xlu0 %v782, 127
        %v969 = vpop.permute.xlu0 %968
        %970 = vrot.lane.b32.xlu0 %v783, 127
        %v971 = vpop.permute.xlu0 %970
        %972 = vrot.lane.b32.xlu0 %v784, 127
        %v973 = vpop.permute.xlu0 %972
        %974 = vrot.lane.b32.xlu0 %v785, 127
        %v975 = vpop.permute.xlu0 %974
        %976 = vrot.lane.b32.xlu0 %v786, 127
        %v977 = vpop.permute.xlu0 %976
        %978 = vrot.lane.b32.xlu0 %v787, 127
        %v979 = vpop.permute.xlu0 %978
        %980 = vrot.lane.b32.xlu0 %v788, 127
        %v981 = vpop.permute.xlu0 %980
        %982 = vrot.lane.b32.xlu0 %v789, 127
        %v983 = vpop.permute.xlu0 %982
        %vm984 = vcmask 1039360
        %v985 = vsel %vm984, %v969, %v971
        %v986 = vsel %vm984, %v971, %v973
        %v987 = vsel %vm984, %v973, %v975
        %v988 = vsel %vm984, %v975, %v977
        %v989 = vsel %vm984, %v977, %v979
        %v990 = vsel %vm984, %v979, %v981
        %v991 = vsel %vm984, %v981, %v983
        %v1000 = vsel %vm984, %v983, 0.0
        %vm1001 = vcmp.lt.s32.totalorder %v515, 31
        %vm1002 = vcmp.lt.s32.totalorder %v516, 31
        %vm1003 = vcmp.lt.s32.totalorder %v517, 31
        %vm1004 = vcmp.lt.s32.totalorder %v518, 31
        %vm1005 = vcmp.lt.s32.totalorder %v519, 31
        %vm1006 = vcmp.lt.s32.totalorder %v520, 31
        %vm1007 = vcmp.lt.s32.totalorder %v521, 31
        %vm1008 = vcmp.lt.s32.totalorder %v522, 31
        %v1009 = vsel %vm1001, 1, 0
        %v1010 = vsel %vm1002, 1, 0
        %v1011 = vsel %vm1003, 1, 0
        %v1012 = vsel %vm1004, 1, 0
        %v1013 = vsel %vm1005, 1, 0
        %v1014 = vsel %vm1006, 1, 0
        %v1015 = vsel %vm1007, 1, 0
        %v1016 = vsel %vm1008, 1, 0
        %vm1017 = vcmp.eq.s32.totalorder %v1009, 1
        %vm1018 = vcmp.eq.s32.totalorder %v1010, 1
        %vm1019 = vcmp.eq.s32.totalorder %v1011, 1
        %vm1020 = vcmp.eq.s32.totalorder %v1012, 1
        %vm1021 = vcmp.eq.s32.totalorder %v1013, 1
        %vm1022 = vcmp.eq.s32.totalorder %v1014, 1
        %vm1023 = vcmp.eq.s32.totalorder %v1015, 1
        %vm1024 = vcmp.eq.s32.totalorder %v1016, 1
        %v1025 = vsel %vm1017, %v985, 0.0
        %v1026 = vsel %vm1018, %v986, 0.0
        %v1027 = vsel %vm1019, %v987, 0.0
        %v1028 = vsel %vm1020, %v988, 0.0
        %v1029 = vsel %vm1021, %v989, 0.0
        %v1030 = vsel %vm1022, %v990, 0.0
        %v1031 = vsel %vm1023, %v991, 0.0
        %v1032 = vsel %vm1024, %v1000, 0.0
        %v1033 = vmul.f32 %v1025, 0.25
        %v1034 = vmul.f32 %v1026, 0.25
        %v1035 = vmul.f32 %v1027, 0.25
        %v1036 = vmul.f32 %v1028, 0.25
        %v1037 = vmul.f32 %v1029, 0.25
        %v1038 = vmul.f32 %v1030, 0.25
        %v1039 = vmul.f32 %v1031, 0.25
        %v1040 = vmul.f32 %v1032, 0.25
        %v1041 = vadd.f32 %v960, %v1033
        %v1042 = vadd.f32 %v961, %v1034
        %v1043 = vadd.f32 %v962, %v1035
        %v1044 = vadd.f32 %v963, %v1036
        %v1045 = vadd.f32 %v964, %v1037
        %v1046 = vadd.f32 %v965, %v1038
        %v1047 = vadd.f32 %v966, %v1039
        %v1048 = vadd.f32 %v967, %v1040
        %vm1049 = vcmp.eq.s32.totalorder %v515, 0
        %vm1050 = vcmp.eq.s32.totalorder %v516, 0
        %vm1051 = vcmp.eq.s32.totalorder %v517, 0
        %vm1052 = vcmp.eq.s32.totalorder %v518, 0
        %vm1053 = vcmp.eq.s32.totalorder %v519, 0
        %vm1054 = vcmp.eq.s32.totalorder %v520, 0
        %vm1055 = vcmp.eq.s32.totalorder %v521, 0
        %vm1056 = vcmp.eq.s32.totalorder %v522, 0
        %v1057 = vmul.f32 %v782, 0.25
        %v1058 = vmul.f32 %v783, 0.25
        %v1059 = vmul.f32 %v784, 0.25
        %v1060 = vmul.f32 %v785, 0.25
        %v1061 = vmul.f32 %v786, 0.25
        %v1062 = vmul.f32 %v787, 0.25
        %v1063 = vmul.f32 %v788, 0.25
        %v1064 = vmul.f32 %v789, 0.25
        %v1065 = vsel %vm1049, 1, 0
        %v1066 = vsel %vm1050, 1, 0
        %v1067 = vsel %vm1051, 1, 0
        %v1068 = vsel %vm1052, 1, 0
        %v1069 = vsel %vm1053, 1, 0
        %v1070 = vsel %vm1054, 1, 0
        %v1071 = vsel %vm1055, 1, 0
        %v1072 = vsel %vm1056, 1, 0
        %vm1073 = vcmp.eq.s32.totalorder %v1065, 1
        %vm1074 = vcmp.eq.s32.totalorder %v1066, 1
        %vm1075 = vcmp.eq.s32.totalorder %v1067, 1
        %vm1076 = vcmp.eq.s32.totalorder %v1068, 1
        %vm1077 = vcmp.eq.s32.totalorder %v1069, 1
        %vm1078 = vcmp.eq.s32.totalorder %v1070, 1
        %vm1079 = vcmp.eq.s32.totalorder %v1071, 1
        %vm1080 = vcmp.eq.s32.totalorder %v1072, 1
        %v1081 = vsel %vm1073, %v1057, 0.0
        %v1082 = vsel %vm1074, %v1058, 0.0
        %v1083 = vsel %vm1075, %v1059, 0.0
        %v1084 = vsel %vm1076, %v1060, 0.0
        %v1085 = vsel %vm1077, %v1061, 0.0
        %v1086 = vsel %vm1078, %v1062, 0.0
        %v1087 = vsel %vm1079, %v1063, 0.0
        %v1088 = vsel %vm1080, %v1064, 0.0
        %v1089 = vadd.f32 %v1041, %v1081
        %v1090 = vadd.f32 %v1042, %v1082
        %v1091 = vadd.f32 %v1043, %v1083
        %v1092 = vadd.f32 %v1044, %v1084
        %v1093 = vadd.f32 %v1045, %v1085
        %v1094 = vadd.f32 %v1046, %v1086
        %v1095 = vadd.f32 %v1047, %v1087
        %v1096 = vadd.f32 %v1048, %v1088
        %vm1097 = vcmp.eq.s32.totalorder %v515, 31
        %vm1098 = vcmp.eq.s32.totalorder %v516, 31
        %vm1099 = vcmp.eq.s32.totalorder %v517, 31
        %vm1100 = vcmp.eq.s32.totalorder %v518, 31
        %vm1101 = vcmp.eq.s32.totalorder %v519, 31
        %vm1102 = vcmp.eq.s32.totalorder %v520, 31
        %vm1103 = vcmp.eq.s32.totalorder %v521, 31
        %vm1104 = vcmp.eq.s32.totalorder %v522, 31
        %v1105 = vmul.f32 %v855, 0.25
        %v1106 = vmul.f32 %v856, 0.25
        %v1107 = vmul.f32 %v857, 0.25
        %v1108 = vmul.f32 %v858, 0.25
        %v1109 = vmul.f32 %v859, 0.25
        %v1110 = vmul.f32 %v860, 0.25
        %v1111 = vmul.f32 %v861, 0.25
        %v1112 = vmul.f32 %v862, 0.25
        %v1113 = vsel %vm1097, 1, 0
        %v1114 = vsel %vm1098, 1, 0
        %v1115 = vsel %vm1099, 1, 0
        %v1116 = vsel %vm1100, 1, 0
        %v1117 = vsel %vm1101, 1, 0
        %v1118 = vsel %vm1102, 1, 0
        %v1119 = vsel %vm1103, 1, 0
        %v1120 = vsel %vm1104, 1, 0
        %vm1121 = vcmp.eq.s32.totalorder %v1113, 1
        %vm1122 = vcmp.eq.s32.totalorder %v1114, 1
        %vm1123 = vcmp.eq.s32.totalorder %v1115, 1
        %vm1124 = vcmp.eq.s32.totalorder %v1116, 1
        %vm1125 = vcmp.eq.s32.totalorder %v1117, 1
        %vm1126 = vcmp.eq.s32.totalorder %v1118, 1
        %vm1127 = vcmp.eq.s32.totalorder %v1119, 1
        %vm1128 = vcmp.eq.s32.totalorder %v1120, 1
        %v1129 = vsel %vm1121, %v1105, 0.0
        %v1130 = vsel %vm1122, %v1106, 0.0
        %v1131 = vsel %vm1123, %v1107, 0.0
        %v1132 = vsel %vm1124, %v1108, 0.0
        %v1133 = vsel %vm1125, %v1109, 0.0
        %v1134 = vsel %vm1126, %v1110, 0.0
        %v1135 = vsel %vm1127, %v1111, 0.0
        %v1136 = vsel %vm1128, %v1112, 0.0
        %v1137 = vadd.f32 %v1089, %v1129
        %v1138 = vadd.f32 %v1090, %v1130
        %v1139 = vadd.f32 %v1091, %v1131
        %v1140 = vadd.f32 %v1092, %v1132
        %v1141 = vadd.f32 %v1093, %v1133
        %v1142 = vadd.f32 %v1094, %v1134
        %v1143 = vadd.f32 %v1095, %v1135
        %v1144 = vadd.f32 %v1096, %v1136
        %v1145 = vld [vmem:[%s375] sm:$0xff]
        %v1146 = vld [vmem:[%s375 + $0x8] sm:$0xff]
        %v1147 = vld [vmem:[%s375 + $0x10] sm:$0xff]
        %v1148 = vld [vmem:[%s375 + $0x18] sm:$0xff]
        %v1149 = vld [vmem:[%s375 + $0x20] sm:$0xff]
        %v1150 = vld [vmem:[%s375 + $0x28] sm:$0xff]
        %v1151 = vld [vmem:[%s375 + $0x30] sm:$0xff]
        %v1152 = vld [vmem:[%s375 + $0x38] sm:$0xff]
        %v1153 = vld [vmem:[%s2] sm:$0xff]
        %v1154 = vld [vmem:[%s3] sm:$0xff]
        %1156 = vset.pattern.permute.xlu0 0
        %1157 = vperm.xlu0 %1156, %v1154
        %v1158 = vpop.permute.xlu0 %1157
        %vm1160 = vcmask 130048
        %v1162 = vsel %vm1160, %v1153, 0
        %1164 = vmatpush.msra.mxu0 0.0
        %1165 = vmatpush.msra.mxu0 0.0
        %1166 = vmatpush.msra.mxu0 0.0
        %1167 = vmatpush.msra.mxu0 0.0
        %1168 = vmatpush.msra.mxu0 0.0
        %1169 = vmatpush.msra.mxu0 0.0
        %1170 = vmatpush.msra.mxu0 0.0
        %1171 = vmatpush.msra.mxu0 0.0
        %1172 = vmatpush.msra.mxu0 0.0
        %1173 = vmatpush.msra.mxu0 0.0
        %1174 = vmatpush.msra.mxu0 0.0
        %1175 = vmatpush.msra.mxu0 0.0
        %1176 = vmatpush.msra.mxu0 0.0
        %1177 = vmatpush.msra.mxu0 0.0
        %1178 = vmatpush.msra.mxu0 %v1145
        %1179 = vmatpush.msra.mxu0 %v1137
        %1180 = vmatmul.f32.gmra.mxu0 %v1162
        %v1181 = vpop.f32.mrf.mxu0
        %v1182 = vadd.f32 %v1158, %v1181
        %1183 = vdwg.mxu0
        %1184 = vmatpush.msra.mxu0 0.0
        %1185 = vmatpush.msra.mxu0 0.0
        %1186 = vmatpush.msra.mxu0 0.0
        %1187 = vmatpush.msra.mxu0 0.0
        %1188 = vmatpush.msra.mxu0 0.0
        %1189 = vmatpush.msra.mxu0 0.0
        %1190 = vmatpush.msra.mxu0 0.0
        %1191 = vmatpush.msra.mxu0 0.0
        %1192 = vmatpush.msra.mxu0 0.0
        %1193 = vmatpush.msra.mxu0 0.0
        %1194 = vmatpush.msra.mxu0 0.0
        %1195 = vmatpush.msra.mxu0 0.0
        %1196 = vmatpush.msra.mxu0 0.0
        %1197 = vmatpush.msra.mxu0 0.0
        %1198 = vmatpush.msra.mxu0 %v1146
        %1199 = vmatpush.msra.mxu0 %v1138
        %1200 = vmatmul.f32.gmra.mxu0 %v1162
        %v1201 = vpop.f32.mrf.mxu0
        %v1202 = vadd.f32 %v1158, %v1201
        %1203 = vdwg.mxu0
        %1204 = vmatpush.msra.mxu0 0.0
        %1205 = vmatpush.msra.mxu0 0.0
        %1206 = vmatpush.msra.mxu0 0.0
        %1207 = vmatpush.msra.mxu0 0.0
        %1208 = vmatpush.msra.mxu0 0.0
        %1209 = vmatpush.msra.mxu0 0.0
        %1210 = vmatpush.msra.mxu0 0.0
        %1211 = vmatpush.msra.mxu0 0.0
        %1212 = vmatpush.msra.mxu0 0.0
        %1213 = vmatpush.msra.mxu0 0.0
        %1214 = vmatpush.msra.mxu0 0.0
        %1215 = vmatpush.msra.mxu0 0.0
        %1216 = vmatpush.msra.mxu0 0.0
        %1217 = vmatpush.msra.mxu0 0.0
        %1218 = vmatpush.msra.mxu0 %v1147
        %1219 = vmatpush.msra.mxu0 %v1139
        %1220 = vmatmul.f32.gmra.mxu0 %v1162
        %v1221 = vpop.f32.mrf.mxu0
        %v1222 = vadd.f32 %v1158, %v1221
        %1223 = vdwg.mxu0
        %1224 = vmatpush.msra.mxu0 0.0
        %1225 = vmatpush.msra.mxu0 0.0
        %1226 = vmatpush.msra.mxu0 0.0
        %1227 = vmatpush.msra.mxu0 0.0
        %1228 = vmatpush.msra.mxu0 0.0
        %1229 = vmatpush.msra.mxu0 0.0
        %1230 = vmatpush.msra.mxu0 0.0
        %1231 = vmatpush.msra.mxu0 0.0
        %1232 = vmatpush.msra.mxu0 0.0
        %1233 = vmatpush.msra.mxu0 0.0
        %1234 = vmatpush.msra.mxu0 0.0
        %1235 = vmatpush.msra.mxu0 0.0
        %1236 = vmatpush.msra.mxu0 0.0
        %1237 = vmatpush.msra.mxu0 0.0
        %1238 = vmatpush.msra.mxu0 %v1148
        %1239 = vmatpush.msra.mxu0 %v1140
        %1240 = vmatmul.f32.gmra.mxu0 %v1162
        %v1241 = vpop.f32.mrf.mxu0
        %v1242 = vadd.f32 %v1158, %v1241
        %1243 = vdwg.mxu0
        %1244 = vmatpush.msra.mxu0 0.0
        %1245 = vmatpush.msra.mxu0 0.0
        %1246 = vmatpush.msra.mxu0 0.0
        %1247 = vmatpush.msra.mxu0 0.0
        %1248 = vmatpush.msra.mxu0 0.0
        %1249 = vmatpush.msra.mxu0 0.0
        %1250 = vmatpush.msra.mxu0 0.0
        %1251 = vmatpush.msra.mxu0 0.0
        %1252 = vmatpush.msra.mxu0 0.0
        %1253 = vmatpush.msra.mxu0 0.0
        %1254 = vmatpush.msra.mxu0 0.0
        %1255 = vmatpush.msra.mxu0 0.0
        %1256 = vmatpush.msra.mxu0 0.0
        %1257 = vmatpush.msra.mxu0 0.0
        %1258 = vmatpush.msra.mxu0 %v1149
        %1259 = vmatpush.msra.mxu0 %v1141
        %1260 = vmatmul.f32.gmra.mxu0 %v1162
        %v1261 = vpop.f32.mrf.mxu0
        %v1262 = vadd.f32 %v1158, %v1261
        %1263 = vdwg.mxu0
        %1264 = vmatpush.msra.mxu0 0.0
        %1265 = vmatpush.msra.mxu0 0.0
        %1266 = vmatpush.msra.mxu0 0.0
        %1267 = vmatpush.msra.mxu0 0.0
        %1268 = vmatpush.msra.mxu0 0.0
        %1269 = vmatpush.msra.mxu0 0.0
        %1270 = vmatpush.msra.mxu0 0.0
        %1271 = vmatpush.msra.mxu0 0.0
        %1272 = vmatpush.msra.mxu0 0.0
        %1273 = vmatpush.msra.mxu0 0.0
        %1274 = vmatpush.msra.mxu0 0.0
        %1275 = vmatpush.msra.mxu0 0.0
        %1276 = vmatpush.msra.mxu0 0.0
        %1277 = vmatpush.msra.mxu0 0.0
        %1278 = vmatpush.msra.mxu0 %v1150
        %1279 = vmatpush.msra.mxu0 %v1142
        %1280 = vmatmul.f32.gmra.mxu0 %v1162
        %v1281 = vpop.f32.mrf.mxu0
        %v1282 = vadd.f32 %v1158, %v1281
        %1283 = vdwg.mxu0
        %1284 = vmatpush.msra.mxu0 0.0
        %1285 = vmatpush.msra.mxu0 0.0
        %1286 = vmatpush.msra.mxu0 0.0
        %1287 = vmatpush.msra.mxu0 0.0
        %1288 = vmatpush.msra.mxu0 0.0
        %1289 = vmatpush.msra.mxu0 0.0
        %1290 = vmatpush.msra.mxu0 0.0
        %1291 = vmatpush.msra.mxu0 0.0
        %1292 = vmatpush.msra.mxu0 0.0
        %1293 = vmatpush.msra.mxu0 0.0
        %1294 = vmatpush.msra.mxu0 0.0
        %1295 = vmatpush.msra.mxu0 0.0
        %1296 = vmatpush.msra.mxu0 0.0
        %1297 = vmatpush.msra.mxu0 0.0
        %1298 = vmatpush.msra.mxu0 %v1151
        %1299 = vmatpush.msra.mxu0 %v1143
        %1300 = vmatmul.f32.gmra.mxu0 %v1162
        %v1301 = vpop.f32.mrf.mxu0
        %v1302 = vadd.f32 %v1158, %v1301
        %1303 = vdwg.mxu0
        %1304 = vmatpush.msra.mxu0 0.0
        %1305 = vmatpush.msra.mxu0 0.0
        %1306 = vmatpush.msra.mxu0 0.0
        %1307 = vmatpush.msra.mxu0 0.0
        %1308 = vmatpush.msra.mxu0 0.0
        %1309 = vmatpush.msra.mxu0 0.0
        %1310 = vmatpush.msra.mxu0 0.0
        %1311 = vmatpush.msra.mxu0 0.0
        %1312 = vmatpush.msra.mxu0 0.0
        %1313 = vmatpush.msra.mxu0 0.0
        %1314 = vmatpush.msra.mxu0 0.0
        %1315 = vmatpush.msra.mxu0 0.0
        %1316 = vmatpush.msra.mxu0 0.0
        %1317 = vmatpush.msra.mxu0 0.0
        %1318 = vmatpush.msra.mxu0 %v1152
        %1319 = vmatpush.msra.mxu0 %v1144
        %1320 = vmatmul.f32.gmra.mxu0 %v1162
        %v1321 = vpop.f32.mrf.mxu0
        %v1322 = vadd.f32 %v1158, %v1321
        %1323 = vdwg.mxu0
        %v1324 = vld [vmem:[%s4] sm:$0xff]
        %v1325 = vld [vmem:[%s5] sm:$0xff]
        %1334 = vrot.lane.b32.xlu0 %v1182, 33
        %v1335 = vpop.permute.xlu0 %1334
        %1336 = vrot.lane.b32.xlu0 %v1202, 33
        %v1337 = vpop.permute.xlu0 %1336
        %1338 = vrot.lane.b32.xlu0 %v1222, 33
        %v1339 = vpop.permute.xlu0 %1338
        %1340 = vrot.lane.b32.xlu0 %v1242, 33
        %v1341 = vpop.permute.xlu0 %1340
        %1342 = vrot.lane.b32.xlu0 %v1262, 33
        %v1343 = vpop.permute.xlu0 %1342
        %1344 = vrot.lane.b32.xlu0 %v1282, 33
        %v1345 = vpop.permute.xlu0 %1344
        %1346 = vrot.lane.b32.xlu0 %v1302, 33
        %v1347 = vpop.permute.xlu0 %1346
        %1348 = vrot.lane.b32.xlu0 %v1322, 33
        %v1349 = vpop.permute.xlu0 %1348
        %vm1350 = vcmask 269312
        %v1351 = vsel %vm1350, %v1335, %v1337
        %v1352 = vsel %vm1350, %v1337, %v1339
        %v1353 = vsel %vm1350, %v1339, %v1341
        %v1354 = vsel %vm1350, %v1341, %v1343
        %v1355 = vsel %vm1350, %v1343, %v1345
        %v1356 = vsel %vm1350, %v1345, %v1347
        %v1357 = vsel %vm1350, %v1347, %v1349
        %v1366 = vsel %vm1350, 0.0, %v1335
        %v1367 = vsel %vm847, %v1366, 0.0
        %v1368 = vsel %vm848, %v1351, 0.0
        %v1369 = vsel %vm849, %v1352, 0.0
        %v1370 = vsel %vm850, %v1353, 0.0
        %v1371 = vsel %vm851, %v1354, 0.0
        %v1372 = vsel %vm852, %v1355, 0.0
        %v1373 = vsel %vm853, %v1356, 0.0
        %v1374 = vsel %vm854, %v1357, 0.0
        %1375 = vrot.lane.b32.xlu0 %v1182, 32
        %v1376 = vpop.permute.xlu0 %1375
        %1377 = vrot.lane.b32.xlu0 %v1202, 32
        %v1378 = vpop.permute.xlu0 %1377
        %1379 = vrot.lane.b32.xlu0 %v1222, 32
        %v1380 = vpop.permute.xlu0 %1379
        %1381 = vrot.lane.b32.xlu0 %v1242, 32
        %v1382 = vpop.permute.xlu0 %1381
        %1383 = vrot.lane.b32.xlu0 %v1262, 32
        %v1384 = vpop.permute.xlu0 %1383
        %1385 = vrot.lane.b32.xlu0 %v1282, 32
        %v1386 = vpop.permute.xlu0 %1385
        %1387 = vrot.lane.b32.xlu0 %v1302, 32
        %v1388 = vpop.permute.xlu0 %1387
        %1389 = vrot.lane.b32.xlu0 %v1322, 32
        %v1390 = vpop.permute.xlu0 %1389
        %v1391 = vsel %vm555, %v1376, %v1378
        %v1392 = vsel %vm555, %v1378, %v1380
        %v1393 = vsel %vm555, %v1380, %v1382
        %v1394 = vsel %vm555, %v1382, %v1384
        %v1395 = vsel %vm555, %v1384, %v1386
        %v1396 = vsel %vm555, %v1386, %v1388
        %v1397 = vsel %vm555, %v1388, %v1390
        %v1406 = vsel %vm555, 0.0, %v1376
        %1407 = vrot.lane.b32.xlu0 %v1182, 31
        %v1408 = vpop.permute.xlu0 %1407
        %1409 = vrot.lane.b32.xlu0 %v1202, 31
        %v1410 = vpop.permute.xlu0 %1409
        %1411 = vrot.lane.b32.xlu0 %v1222, 31
        %v1412 = vpop.permute.xlu0 %1411
        %1413 = vrot.lane.b32.xlu0 %v1242, 31
        %v1414 = vpop.permute.xlu0 %1413
        %1415 = vrot.lane.b32.xlu0 %v1262, 31
        %v1416 = vpop.permute.xlu0 %1415
        %1417 = vrot.lane.b32.xlu0 %v1282, 31
        %v1418 = vpop.permute.xlu0 %1417
        %1419 = vrot.lane.b32.xlu0 %v1302, 31
        %v1420 = vpop.permute.xlu0 %1419
        %1421 = vrot.lane.b32.xlu0 %v1322, 31
        %v1422 = vpop.permute.xlu0 %1421
        %vm1423 = vcmask 252928
        %v1424 = vsel %vm1423, %v1408, %v1410
        %v1425 = vsel %vm1423, %v1410, %v1412
        %v1426 = vsel %vm1423, %v1412, %v1414
        %v1427 = vsel %vm1423, %v1414, %v1416
        %v1428 = vsel %vm1423, %v1416, %v1418
        %v1429 = vsel %vm1423, %v1418, %v1420
        %v1430 = vsel %vm1423, %v1420, %v1422
        %v1439 = vsel %vm1423, 0.0, %v1408
        %v1440 = vsel %vm1017, %v1439, 0.0
        %v1441 = vsel %vm1018, %v1424, 0.0
        %v1442 = vsel %vm1019, %v1425, 0.0
        %v1443 = vsel %vm1020, %v1426, 0.0
        %v1444 = vsel %vm1021, %v1427, 0.0
        %v1445 = vsel %vm1022, %v1428, 0.0
        %v1446 = vsel %vm1023, %v1429, 0.0
        %v1447 = vsel %vm1024, %v1430, 0.0
        %1448 = vrot.lane.b32.xlu0 %v1182, 1
        %v1449 = vpop.permute.xlu0 %1448
        %1450 = vrot.lane.b32.xlu0 %v1202, 1
        %v1451 = vpop.permute.xlu0 %1450
        %1452 = vrot.lane.b32.xlu0 %v1222, 1
        %v1453 = vpop.permute.xlu0 %1452
        %1454 = vrot.lane.b32.xlu0 %v1242, 1
        %v1455 = vpop.permute.xlu0 %1454
        %1456 = vrot.lane.b32.xlu0 %v1262, 1
        %v1457 = vpop.permute.xlu0 %1456
        %1458 = vrot.lane.b32.xlu0 %v1282, 1
        %v1459 = vpop.permute.xlu0 %1458
        %1460 = vrot.lane.b32.xlu0 %v1302, 1
        %v1461 = vpop.permute.xlu0 %1460
        %1462 = vrot.lane.b32.xlu0 %v1322, 1
        %v1463 = vpop.permute.xlu0 %1462
        %v1464 = vsel %vm814, %v1449, %v1451
        %v1465 = vsel %vm814, %v1451, %v1453
        %v1466 = vsel %vm814, %v1453, %v1455
        %v1467 = vsel %vm814, %v1455, %v1457
        %v1468 = vsel %vm814, %v1457, %v1459
        %v1469 = vsel %vm814, %v1459, %v1461
        %v1470 = vsel %vm814, %v1461, %v1463
        %v1479 = vsel %vm814, 0.0, %v1449
        %v1480 = vsel %vm847, %v1479, 0.0
        %v1481 = vsel %vm848, %v1464, 0.0
        %v1482 = vsel %vm849, %v1465, 0.0
        %v1483 = vsel %vm850, %v1466, 0.0
        %v1484 = vsel %vm851, %v1467, 0.0
        %v1485 = vsel %vm852, %v1468, 0.0
        %v1486 = vsel %vm853, %v1469, 0.0
        %v1487 = vsel %vm854, %v1470, 0.0
        %1488 = vrot.lane.b32.xlu0 %v1182, 127
        %v1489 = vpop.permute.xlu0 %1488
        %1490 = vrot.lane.b32.xlu0 %v1202, 127
        %v1491 = vpop.permute.xlu0 %1490
        %1492 = vrot.lane.b32.xlu0 %v1222, 127
        %v1493 = vpop.permute.xlu0 %1492
        %1494 = vrot.lane.b32.xlu0 %v1242, 127
        %v1495 = vpop.permute.xlu0 %1494
        %1496 = vrot.lane.b32.xlu0 %v1262, 127
        %v1497 = vpop.permute.xlu0 %1496
        %1498 = vrot.lane.b32.xlu0 %v1282, 127
        %v1499 = vpop.permute.xlu0 %1498
        %1500 = vrot.lane.b32.xlu0 %v1302, 127
        %v1501 = vpop.permute.xlu0 %1500
        %1502 = vrot.lane.b32.xlu0 %v1322, 127
        %v1503 = vpop.permute.xlu0 %1502
        %v1504 = vsel %vm984, %v1489, %v1491
        %v1505 = vsel %vm984, %v1491, %v1493
        %v1506 = vsel %vm984, %v1493, %v1495
        %v1507 = vsel %vm984, %v1495, %v1497
        %v1508 = vsel %vm984, %v1497, %v1499
        %v1509 = vsel %vm984, %v1499, %v1501
        %v1510 = vsel %vm984, %v1501, %v1503
        %v1519 = vsel %vm984, %v1503, 0.0
        %v1520 = vsel %vm1017, %v1504, 0.0
        %v1521 = vsel %vm1018, %v1505, 0.0
        %v1522 = vsel %vm1019, %v1506, 0.0
        %v1523 = vsel %vm1020, %v1507, 0.0
        %v1524 = vsel %vm1021, %v1508, 0.0
        %v1525 = vsel %vm1022, %v1509, 0.0
        %v1526 = vsel %vm1023, %v1510, 0.0
        %v1527 = vsel %vm1024, %v1519, 0.0
        %1528 = vrot.lane.b32.xlu0 %v1182, 97
        %v1529 = vpop.permute.xlu0 %1528
        %1530 = vrot.lane.b32.xlu0 %v1202, 97
        %v1531 = vpop.permute.xlu0 %1530
        %1532 = vrot.lane.b32.xlu0 %v1222, 97
        %v1533 = vpop.permute.xlu0 %1532
        %1534 = vrot.lane.b32.xlu0 %v1242, 97
        %v1535 = vpop.permute.xlu0 %1534
        %1536 = vrot.lane.b32.xlu0 %v1262, 97
        %v1537 = vpop.permute.xlu0 %1536
        %1538 = vrot.lane.b32.xlu0 %v1282, 97
        %v1539 = vpop.permute.xlu0 %1538
        %1540 = vrot.lane.b32.xlu0 %v1302, 97
        %v1541 = vpop.permute.xlu0 %1540
        %1542 = vrot.lane.b32.xlu0 %v1322, 97
        %v1543 = vpop.permute.xlu0 %1542
        %vm1544 = vcmask 793600
        %v1545 = vsel %vm1544, %v1529, %v1531
        %v1546 = vsel %vm1544, %v1531, %v1533
        %v1547 = vsel %vm1544, %v1533, %v1535
        %v1548 = vsel %vm1544, %v1535, %v1537
        %v1549 = vsel %vm1544, %v1537, %v1539
        %v1550 = vsel %vm1544, %v1539, %v1541
        %v1551 = vsel %vm1544, %v1541, %v1543
        %v1560 = vsel %vm1544, %v1543, 0.0
        %v1561 = vsel %vm847, %v1545, 0.0
        %v1562 = vsel %vm848, %v1546, 0.0
        %v1563 = vsel %vm849, %v1547, 0.0
        %v1564 = vsel %vm850, %v1548, 0.0
        %v1565 = vsel %vm851, %v1549, 0.0
        %v1566 = vsel %vm852, %v1550, 0.0
        %v1567 = vsel %vm853, %v1551, 0.0
        %v1568 = vsel %vm854, %v1560, 0.0
        %1569 = vrot.lane.b32.xlu0 %v1182, 96
        %v1570 = vpop.permute.xlu0 %1569
        %1571 = vrot.lane.b32.xlu0 %v1202, 96
        %v1572 = vpop.permute.xlu0 %1571
        %1573 = vrot.lane.b32.xlu0 %v1222, 96
        %v1574 = vpop.permute.xlu0 %1573
        %1575 = vrot.lane.b32.xlu0 %v1242, 96
        %v1576 = vpop.permute.xlu0 %1575
        %1577 = vrot.lane.b32.xlu0 %v1262, 96
        %v1578 = vpop.permute.xlu0 %1577
        %1579 = vrot.lane.b32.xlu0 %v1282, 96
        %v1580 = vpop.permute.xlu0 %1579
        %1581 = vrot.lane.b32.xlu0 %v1302, 96
        %v1582 = vpop.permute.xlu0 %1581
        %1583 = vrot.lane.b32.xlu0 %v1322, 96
        %v1584 = vpop.permute.xlu0 %1583
        %v1585 = vsel %vm661, %v1570, %v1572
        %v1586 = vsel %vm661, %v1572, %v1574
        %v1587 = vsel %vm661, %v1574, %v1576
        %v1588 = vsel %vm661, %v1576, %v1578
        %v1589 = vsel %vm661, %v1578, %v1580
        %v1590 = vsel %vm661, %v1580, %v1582
        %v1591 = vsel %vm661, %v1582, %v1584
        %v1600 = vsel %vm661, %v1584, 0.0
        %1601 = vrot.lane.b32.xlu0 %v1182, 95
        %v1602 = vpop.permute.xlu0 %1601
        %1603 = vrot.lane.b32.xlu0 %v1202, 95
        %v1604 = vpop.permute.xlu0 %1603
        %1605 = vrot.lane.b32.xlu0 %v1222, 95
        %v1606 = vpop.permute.xlu0 %1605
        %1607 = vrot.lane.b32.xlu0 %v1242, 95
        %v1608 = vpop.permute.xlu0 %1607
        %1609 = vrot.lane.b32.xlu0 %v1262, 95
        %v1610 = vpop.permute.xlu0 %1609
        %1611 = vrot.lane.b32.xlu0 %v1282, 95
        %v1612 = vpop.permute.xlu0 %1611
        %1613 = vrot.lane.b32.xlu0 %v1302, 95
        %v1614 = vpop.permute.xlu0 %1613
        %1615 = vrot.lane.b32.xlu0 %v1322, 95
        %v1616 = vpop.permute.xlu0 %1615
        %vm1617 = vcmask 777216
        %v1618 = vsel %vm1617, %v1602, %v1604
        %v1619 = vsel %vm1617, %v1604, %v1606
        %v1620 = vsel %vm1617, %v1606, %v1608
        %v1621 = vsel %vm1617, %v1608, %v1610
        %v1622 = vsel %vm1617, %v1610, %v1612
        %v1623 = vsel %vm1617, %v1612, %v1614
        %v1624 = vsel %vm1617, %v1614, %v1616
        %v1633 = vsel %vm1617, %v1616, 0.0
        %v1634 = vsel %vm1017, %v1618, 0.0
        %v1635 = vsel %vm1018, %v1619, 0.0
        %v1636 = vsel %vm1019, %v1620, 0.0
        %v1637 = vsel %vm1020, %v1621, 0.0
        %v1638 = vsel %vm1021, %v1622, 0.0
        %v1639 = vsel %vm1022, %v1623, 0.0
        %v1640 = vsel %vm1023, %v1624, 0.0
        %v1641 = vsel %vm1024, %v1633, 0.0
        %1643 = vset.pattern.permute.xlu0 0
        %1644 = vperm.xlu0 %1643, %v1325
        %v1645 = vpop.permute.xlu0 %1644
        %vm1647 = vcmask 588800
        %v1649 = vsel %vm1647, %v1324, 0
        %1651 = vmatpush.msra.mxu0 0.0
        %1652 = vmatpush.msra.mxu0 0.0
        %1653 = vmatpush.msra.mxu0 0.0
        %1654 = vmatpush.msra.mxu0 0.0
        %1655 = vmatpush.msra.mxu0 0.0
        %1656 = vmatpush.msra.mxu0 0.0
        %1657 = vmatpush.msra.mxu0 0.0
        %1658 = vmatpush.msra.mxu0 %v1634
        %1659 = vmatpush.msra.mxu0 %v1585
        %1660 = vmatpush.msra.mxu0 %v1561
        %1661 = vmatpush.msra.mxu0 %v1520
        %1662 = vmatpush.msra.mxu0 %v1182
        %1663 = vmatpush.msra.mxu0 %v1480
        %1664 = vmatpush.msra.mxu0 %v1440
        %1665 = vmatpush.msra.mxu0 %v1406
        %1666 = vmatpush.msra.mxu0 %v1367
        %1667 = vmatmul.f32.gmra.mxu0 %v1649
        %v1668 = vpop.f32.mrf.mxu0
        %v1669 = vadd.f32 %v1645, %v1668
        %1670 = vdwg.mxu0
        %1671 = vmatpush.msra.mxu0 0.0
        %1672 = vmatpush.msra.mxu0 0.0
        %1673 = vmatpush.msra.mxu0 0.0
        %1674 = vmatpush.msra.mxu0 0.0
        %1675 = vmatpush.msra.mxu0 0.0
        %1676 = vmatpush.msra.mxu0 0.0
        %1677 = vmatpush.msra.mxu0 0.0
        %1678 = vmatpush.msra.mxu0 %v1635
        %1679 = vmatpush.msra.mxu0 %v1586
        %1680 = vmatpush.msra.mxu0 %v1562
        %1681 = vmatpush.msra.mxu0 %v1521
        %1682 = vmatpush.msra.mxu0 %v1202
        %1683 = vmatpush.msra.mxu0 %v1481
        %1684 = vmatpush.msra.mxu0 %v1441
        %1685 = vmatpush.msra.mxu0 %v1391
        %1686 = vmatpush.msra.mxu0 %v1368
        %1687 = vmatmul.f32.gmra.mxu0 %v1649
        %v1688 = vpop.f32.mrf.mxu0
        %v1689 = vadd.f32 %v1645, %v1688
        %1690 = vdwg.mxu0
        %1691 = vmatpush.msra.mxu0 0.0
        %1692 = vmatpush.msra.mxu0 0.0
        %1693 = vmatpush.msra.mxu0 0.0
        %1694 = vmatpush.msra.mxu0 0.0
        %1695 = vmatpush.msra.mxu0 0.0
        %1696 = vmatpush.msra.mxu0 0.0
        %1697 = vmatpush.msra.mxu0 0.0
        %1698 = vmatpush.msra.mxu0 %v1636
        %1699 = vmatpush.msra.mxu0 %v1587
        %1700 = vmatpush.msra.mxu0 %v1563
        %1701 = vmatpush.msra.mxu0 %v1522
        %1702 = vmatpush.msra.mxu0 %v1222
        %1703 = vmatpush.msra.mxu0 %v1482
        %1704 = vmatpush.msra.mxu0 %v1442
        %1705 = vmatpush.msra.mxu0 %v1392
        %1706 = vmatpush.msra.mxu0 %v1369
        %1707 = vmatmul.f32.gmra.mxu0 %v1649
        %v1708 = vpop.f32.mrf.mxu0
        %v1709 = vadd.f32 %v1645, %v1708
        %1710 = vdwg.mxu0
        %1711 = vmatpush.msra.mxu0 0.0
        %1712 = vmatpush.msra.mxu0 0.0
        %1713 = vmatpush.msra.mxu0 0.0
        %1714 = vmatpush.msra.mxu0 0.0
        %1715 = vmatpush.msra.mxu0 0.0
        %1716 = vmatpush.msra.mxu0 0.0
        %1717 = vmatpush.msra.mxu0 0.0
        %1718 = vmatpush.msra.mxu0 %v1637
        %1719 = vmatpush.msra.mxu0 %v1588
        %1720 = vmatpush.msra.mxu0 %v1564
        %1721 = vmatpush.msra.mxu0 %v1523
        %1722 = vmatpush.msra.mxu0 %v1242
        %1723 = vmatpush.msra.mxu0 %v1483
        %1724 = vmatpush.msra.mxu0 %v1443
        %1725 = vmatpush.msra.mxu0 %v1393
        %1726 = vmatpush.msra.mxu0 %v1370
        %1727 = vmatmul.f32.gmra.mxu0 %v1649
        %v1728 = vpop.f32.mrf.mxu0
        %v1729 = vadd.f32 %v1645, %v1728
        %1730 = vdwg.mxu0
        %1731 = vmatpush.msra.mxu0 0.0
        %1732 = vmatpush.msra.mxu0 0.0
        %1733 = vmatpush.msra.mxu0 0.0
        %1734 = vmatpush.msra.mxu0 0.0
        %1735 = vmatpush.msra.mxu0 0.0
        %1736 = vmatpush.msra.mxu0 0.0
        %1737 = vmatpush.msra.mxu0 0.0
        %1738 = vmatpush.msra.mxu0 %v1638
        %1739 = vmatpush.msra.mxu0 %v1589
        %1740 = vmatpush.msra.mxu0 %v1565
        %1741 = vmatpush.msra.mxu0 %v1524
        %1742 = vmatpush.msra.mxu0 %v1262
        %1743 = vmatpush.msra.mxu0 %v1484
        %1744 = vmatpush.msra.mxu0 %v1444
        %1745 = vmatpush.msra.mxu0 %v1394
        %1746 = vmatpush.msra.mxu0 %v1371
        %1747 = vmatmul.f32.gmra.mxu0 %v1649
        %v1748 = vpop.f32.mrf.mxu0
        %v1749 = vadd.f32 %v1645, %v1748
        %1750 = vdwg.mxu0
        %1751 = vmatpush.msra.mxu0 0.0
        %1752 = vmatpush.msra.mxu0 0.0
        %1753 = vmatpush.msra.mxu0 0.0
        %1754 = vmatpush.msra.mxu0 0.0
        %1755 = vmatpush.msra.mxu0 0.0
        %1756 = vmatpush.msra.mxu0 0.0
        %1757 = vmatpush.msra.mxu0 0.0
        %1758 = vmatpush.msra.mxu0 %v1639
        %1759 = vmatpush.msra.mxu0 %v1590
        %1760 = vmatpush.msra.mxu0 %v1566
        %1761 = vmatpush.msra.mxu0 %v1525
        %1762 = vmatpush.msra.mxu0 %v1282
        %1763 = vmatpush.msra.mxu0 %v1485
        %1764 = vmatpush.msra.mxu0 %v1445
        %1765 = vmatpush.msra.mxu0 %v1395
        %1766 = vmatpush.msra.mxu0 %v1372
        %1767 = vmatmul.f32.gmra.mxu0 %v1649
        %v1768 = vpop.f32.mrf.mxu0
        %v1769 = vadd.f32 %v1645, %v1768
        %1770 = vdwg.mxu0
        %1771 = vmatpush.msra.mxu0 0.0
        %1772 = vmatpush.msra.mxu0 0.0
        %1773 = vmatpush.msra.mxu0 0.0
        %1774 = vmatpush.msra.mxu0 0.0
        %1775 = vmatpush.msra.mxu0 0.0
        %1776 = vmatpush.msra.mxu0 0.0
        %1777 = vmatpush.msra.mxu0 0.0
        %1778 = vmatpush.msra.mxu0 %v1640
        %1779 = vmatpush.msra.mxu0 %v1591
        %1780 = vmatpush.msra.mxu0 %v1567
        %1781 = vmatpush.msra.mxu0 %v1526
        %1782 = vmatpush.msra.mxu0 %v1302
        %1783 = vmatpush.msra.mxu0 %v1486
        %1784 = vmatpush.msra.mxu0 %v1446
        %1785 = vmatpush.msra.mxu0 %v1396
        %1786 = vmatpush.msra.mxu0 %v1373
        %1787 = vmatmul.f32.gmra.mxu0 %v1649
        %v1788 = vpop.f32.mrf.mxu0
        %v1789 = vadd.f32 %v1645, %v1788
        %1790 = vdwg.mxu0
        %1791 = vmatpush.msra.mxu0 0.0
        %1792 = vmatpush.msra.mxu0 0.0
        %1793 = vmatpush.msra.mxu0 0.0
        %1794 = vmatpush.msra.mxu0 0.0
        %1795 = vmatpush.msra.mxu0 0.0
        %1796 = vmatpush.msra.mxu0 0.0
        %1797 = vmatpush.msra.mxu0 0.0
        %1798 = vmatpush.msra.mxu0 %v1641
        %1799 = vmatpush.msra.mxu0 %v1600
        %1800 = vmatpush.msra.mxu0 %v1568
        %1801 = vmatpush.msra.mxu0 %v1527
        %1802 = vmatpush.msra.mxu0 %v1322
        %1803 = vmatpush.msra.mxu0 %v1487
        %1804 = vmatpush.msra.mxu0 %v1447
        %1805 = vmatpush.msra.mxu0 %v1397
        %1806 = vmatpush.msra.mxu0 %v1374
        %1807 = vmatmul.f32.gmra.mxu0 %v1649
        %v1808 = vpop.f32.mrf.mxu0
        %v1809 = vadd.f32 %v1645, %v1808
        %1810 = vdwg.mxu0
        %vm1811 = vcmp.ge.f32.partialorder %v1669, 0.0
        %vm1812 = vcmp.ge.f32.partialorder %v1689, 0.0
        %vm1813 = vcmp.ge.f32.partialorder %v1709, 0.0
        %vm1814 = vcmp.ge.f32.partialorder %v1729, 0.0
        %vm1815 = vcmp.ge.f32.partialorder %v1749, 0.0
        %vm1816 = vcmp.ge.f32.partialorder %v1769, 0.0
        %vm1817 = vcmp.ge.f32.partialorder %v1789, 0.0
        %vm1818 = vcmp.ge.f32.partialorder %v1809, 0.0
        %v1819 = vmul.f32 %v1669, 0.01
        %v1820 = vmul.f32 %v1689, 0.01
        %v1821 = vmul.f32 %v1709, 0.01
        %v1822 = vmul.f32 %v1729, 0.01
        %v1823 = vmul.f32 %v1749, 0.01
        %v1824 = vmul.f32 %v1769, 0.01
        %v1825 = vmul.f32 %v1789, 0.01
        %v1826 = vmul.f32 %v1809, 0.01
        %v1827 = vsel %vm1811, %v1669, %v1819
        %v1828 = vsel %vm1812, %v1689, %v1820
        %v1829 = vsel %vm1813, %v1709, %v1821
        %v1830 = vsel %vm1814, %v1729, %v1822
        %v1831 = vsel %vm1815, %v1749, %v1823
        %v1832 = vsel %vm1816, %v1769, %v1824
        %v1833 = vsel %vm1817, %v1789, %v1825
        %v1834 = vsel %vm1818, %v1809, %v1826
        %v1835 = vld [vmem:[%s6] sm:$0xff]
        %v1836 = vld [vmem:[%s7] sm:$0xff]
        %1838 = vset.pattern.permute.xlu0 0
        %1839 = vperm.xlu0 %1838, %v1836
        %v1840 = vpop.permute.xlu0 %1839
        %vm1842 = vcmask 195584
        %v1844 = vsel %vm1842, %v1835, 0
        %1846 = vmatpush.msra.mxu0 0.0
        %1847 = vmatpush.msra.mxu0 0.0
        %1848 = vmatpush.msra.mxu0 0.0
        %1849 = vmatpush.msra.mxu0 0.0
        %1850 = vmatpush.msra.mxu0 0.0
        %1851 = vmatpush.msra.mxu0 0.0
        %1852 = vmatpush.msra.mxu0 0.0
        %1853 = vmatpush.msra.mxu0 0.0
        %1854 = vmatpush.msra.mxu0 0.0
        %1855 = vmatpush.msra.mxu0 0.0
        %1856 = vmatpush.msra.mxu0 0.0
        %1857 = vmatpush.msra.mxu0 0.0
        %1858 = vmatpush.msra.mxu0 0.0
        %1859 = vmatpush.msra.mxu0 %v1827
        %1860 = vmatpush.msra.mxu0 %v1145
        %1861 = vmatpush.msra.mxu0 %v1137
        %1862 = vmatmul.f32.gmra.mxu0 %v1844
        %v1863 = vpop.f32.mrf.mxu0
        %v1864 = vadd.f32 %v1840, %v1863
        %1865 = vdwg.mxu0
        %1866 = vmatpush.msra.mxu0 0.0
        %1867 = vmatpush.msra.mxu0 0.0
        %1868 = vmatpush.msra.mxu0 0.0
        %1869 = vmatpush.msra.mxu0 0.0
        %1870 = vmatpush.msra.mxu0 0.0
        %1871 = vmatpush.msra.mxu0 0.0
        %1872 = vmatpush.msra.mxu0 0.0
        %1873 = vmatpush.msra.mxu0 0.0
        %1874 = vmatpush.msra.mxu0 0.0
        %1875 = vmatpush.msra.mxu0 0.0
        %1876 = vmatpush.msra.mxu0 0.0
        %1877 = vmatpush.msra.mxu0 0.0
        %1878 = vmatpush.msra.mxu0 0.0
        %1879 = vmatpush.msra.mxu0 %v1828
        %1880 = vmatpush.msra.mxu0 %v1146
        %1881 = vmatpush.msra.mxu0 %v1138
        %1882 = vmatmul.f32.gmra.mxu0 %v1844
        %v1883 = vpop.f32.mrf.mxu0
        %v1884 = vadd.f32 %v1840, %v1883
        %1885 = vdwg.mxu0
        %1886 = vmatpush.msra.mxu0 0.0
        %1887 = vmatpush.msra.mxu0 0.0
        %1888 = vmatpush.msra.mxu0 0.0
        %1889 = vmatpush.msra.mxu0 0.0
        %1890 = vmatpush.msra.mxu0 0.0
        %1891 = vmatpush.msra.mxu0 0.0
        %1892 = vmatpush.msra.mxu0 0.0
        %1893 = vmatpush.msra.mxu0 0.0
        %1894 = vmatpush.msra.mxu0 0.0
        %1895 = vmatpush.msra.mxu0 0.0
        %1896 = vmatpush.msra.mxu0 0.0
        %1897 = vmatpush.msra.mxu0 0.0
        %1898 = vmatpush.msra.mxu0 0.0
        %1899 = vmatpush.msra.mxu0 %v1829
        %1900 = vmatpush.msra.mxu0 %v1147
        %1901 = vmatpush.msra.mxu0 %v1139
        %1902 = vmatmul.f32.gmra.mxu0 %v1844
        %v1903 = vpop.f32.mrf.mxu0
        %v1904 = vadd.f32 %v1840, %v1903
        %1905 = vdwg.mxu0
        %1906 = vmatpush.msra.mxu0 0.0
        %1907 = vmatpush.msra.mxu0 0.0
        %1908 = vmatpush.msra.mxu0 0.0
        %1909 = vmatpush.msra.mxu0 0.0
        %1910 = vmatpush.msra.mxu0 0.0
        %1911 = vmatpush.msra.mxu0 0.0
        %1912 = vmatpush.msra.mxu0 0.0
        %1913 = vmatpush.msra.mxu0 0.0
        %1914 = vmatpush.msra.mxu0 0.0
        %1915 = vmatpush.msra.mxu0 0.0
        %1916 = vmatpush.msra.mxu0 0.0
        %1917 = vmatpush.msra.mxu0 0.0
        %1918 = vmatpush.msra.mxu0 0.0
        %1919 = vmatpush.msra.mxu0 %v1830
        %1920 = vmatpush.msra.mxu0 %v1148
        %1921 = vmatpush.msra.mxu0 %v1140
        %1922 = vmatmul.f32.gmra.mxu0 %v1844
        %v1923 = vpop.f32.mrf.mxu0
        %v1924 = vadd.f32 %v1840, %v1923
        %1925 = vdwg.mxu0
        %1926 = vmatpush.msra.mxu0 0.0
        %1927 = vmatpush.msra.mxu0 0.0
        %1928 = vmatpush.msra.mxu0 0.0
        %1929 = vmatpush.msra.mxu0 0.0
        %1930 = vmatpush.msra.mxu0 0.0
        %1931 = vmatpush.msra.mxu0 0.0
        %1932 = vmatpush.msra.mxu0 0.0
        %1933 = vmatpush.msra.mxu0 0.0
        %1934 = vmatpush.msra.mxu0 0.0
        %1935 = vmatpush.msra.mxu0 0.0
        %1936 = vmatpush.msra.mxu0 0.0
        %1937 = vmatpush.msra.mxu0 0.0
        %1938 = vmatpush.msra.mxu0 0.0
        %1939 = vmatpush.msra.mxu0 %v1831
        %1940 = vmatpush.msra.mxu0 %v1149
        %1941 = vmatpush.msra.mxu0 %v1141
        %1942 = vmatmul.f32.gmra.mxu0 %v1844
        %v1943 = vpop.f32.mrf.mxu0
        %v1944 = vadd.f32 %v1840, %v1943
        %1945 = vdwg.mxu0
        %1946 = vmatpush.msra.mxu0 0.0
        %1947 = vmatpush.msra.mxu0 0.0
        %1948 = vmatpush.msra.mxu0 0.0
        %1949 = vmatpush.msra.mxu0 0.0
        %1950 = vmatpush.msra.mxu0 0.0
        %1951 = vmatpush.msra.mxu0 0.0
        %1952 = vmatpush.msra.mxu0 0.0
        %1953 = vmatpush.msra.mxu0 0.0
        %1954 = vmatpush.msra.mxu0 0.0
        %1955 = vmatpush.msra.mxu0 0.0
        %1956 = vmatpush.msra.mxu0 0.0
        %1957 = vmatpush.msra.mxu0 0.0
        %1958 = vmatpush.msra.mxu0 0.0
        %1959 = vmatpush.msra.mxu0 %v1832
        %1960 = vmatpush.msra.mxu0 %v1150
        %1961 = vmatpush.msra.mxu0 %v1142
        %1962 = vmatmul.f32.gmra.mxu0 %v1844
        %v1963 = vpop.f32.mrf.mxu0
        %v1964 = vadd.f32 %v1840, %v1963
        %1965 = vdwg.mxu0
        %1966 = vmatpush.msra.mxu0 0.0
        %1967 = vmatpush.msra.mxu0 0.0
        %1968 = vmatpush.msra.mxu0 0.0
        %1969 = vmatpush.msra.mxu0 0.0
        %1970 = vmatpush.msra.mxu0 0.0
        %1971 = vmatpush.msra.mxu0 0.0
        %1972 = vmatpush.msra.mxu0 0.0
        %1973 = vmatpush.msra.mxu0 0.0
        %1974 = vmatpush.msra.mxu0 0.0
        %1975 = vmatpush.msra.mxu0 0.0
        %1976 = vmatpush.msra.mxu0 0.0
        %1977 = vmatpush.msra.mxu0 0.0
        %1978 = vmatpush.msra.mxu0 0.0
        %1979 = vmatpush.msra.mxu0 %v1833
        %1980 = vmatpush.msra.mxu0 %v1151
        %1981 = vmatpush.msra.mxu0 %v1143
        %1982 = vmatmul.f32.gmra.mxu0 %v1844
        %v1983 = vpop.f32.mrf.mxu0
        %v1984 = vadd.f32 %v1840, %v1983
        %1985 = vdwg.mxu0
        %1986 = vmatpush.msra.mxu0 0.0
        %1987 = vmatpush.msra.mxu0 0.0
        %1988 = vmatpush.msra.mxu0 0.0
        %1989 = vmatpush.msra.mxu0 0.0
        %1990 = vmatpush.msra.mxu0 0.0
        %1991 = vmatpush.msra.mxu0 0.0
        %1992 = vmatpush.msra.mxu0 0.0
        %1993 = vmatpush.msra.mxu0 0.0
        %1994 = vmatpush.msra.mxu0 0.0
        %1995 = vmatpush.msra.mxu0 0.0
        %1996 = vmatpush.msra.mxu0 0.0
        %1997 = vmatpush.msra.mxu0 0.0
        %1998 = vmatpush.msra.mxu0 0.0
        %1999 = vmatpush.msra.mxu0 %v1834
        %2000 = vmatpush.msra.mxu0 %v1152
        %2001 = vmatpush.msra.mxu0 %v1144
        %2002 = vmatmul.f32.gmra.mxu0 %v1844
        %v2003 = vpop.f32.mrf.mxu0
        %v2004 = vadd.f32 %v1840, %v2003
        %2005 = vdwg.mxu0
        %v2006 = vld [vmem:[%s8] sm:$0xff]
        %v2007 = vld [vmem:[%s9] sm:$0xff]
        %2016 = vrot.lane.b32.xlu0 %v1864, 33
        %v2017 = vpop.permute.xlu0 %2016
        %2018 = vrot.lane.b32.xlu0 %v1884, 33
        %v2019 = vpop.permute.xlu0 %2018
        %2020 = vrot.lane.b32.xlu0 %v1904, 33
        %v2021 = vpop.permute.xlu0 %2020
        %2022 = vrot.lane.b32.xlu0 %v1924, 33
        %v2023 = vpop.permute.xlu0 %2022
        %2024 = vrot.lane.b32.xlu0 %v1944, 33
        %v2025 = vpop.permute.xlu0 %2024
        %2026 = vrot.lane.b32.xlu0 %v1964, 33
        %v2027 = vpop.permute.xlu0 %2026
        %2028 = vrot.lane.b32.xlu0 %v1984, 33
        %v2029 = vpop.permute.xlu0 %2028
        %2030 = vrot.lane.b32.xlu0 %v2004, 33
        %v2031 = vpop.permute.xlu0 %2030
        %v2032 = vsel %vm1350, %v2017, %v2019
        %v2033 = vsel %vm1350, %v2019, %v2021
        %v2034 = vsel %vm1350, %v2021, %v2023
        %v2035 = vsel %vm1350, %v2023, %v2025
        %v2036 = vsel %vm1350, %v2025, %v2027
        %v2037 = vsel %vm1350, %v2027, %v2029
        %v2038 = vsel %vm1350, %v2029, %v2031
        %v2047 = vsel %vm1350, 0.0, %v2017
        %v2048 = vsel %vm847, %v2047, 0.0
        %v2049 = vsel %vm848, %v2032, 0.0
        %v2050 = vsel %vm849, %v2033, 0.0
        %v2051 = vsel %vm850, %v2034, 0.0
        %v2052 = vsel %vm851, %v2035, 0.0
        %v2053 = vsel %vm852, %v2036, 0.0
        %v2054 = vsel %vm853, %v2037, 0.0
        %v2055 = vsel %vm854, %v2038, 0.0
        %2056 = vrot.lane.b32.xlu0 %v1864, 32
        %v2057 = vpop.permute.xlu0 %2056
        %2058 = vrot.lane.b32.xlu0 %v1884, 32
        %v2059 = vpop.permute.xlu0 %2058
        %2060 = vrot.lane.b32.xlu0 %v1904, 32
        %v2061 = vpop.permute.xlu0 %2060
        %2062 = vrot.lane.b32.xlu0 %v1924, 32
        %v2063 = vpop.permute.xlu0 %2062
        %2064 = vrot.lane.b32.xlu0 %v1944, 32
        %v2065 = vpop.permute.xlu0 %2064
        %2066 = vrot.lane.b32.xlu0 %v1964, 32
        %v2067 = vpop.permute.xlu0 %2066
        %2068 = vrot.lane.b32.xlu0 %v1984, 32
        %v2069 = vpop.permute.xlu0 %2068
        %2070 = vrot.lane.b32.xlu0 %v2004, 32
        %v2071 = vpop.permute.xlu0 %2070
        %v2072 = vsel %vm555, %v2057, %v2059
        %v2073 = vsel %vm555, %v2059, %v2061
        %v2074 = vsel %vm555, %v2061, %v2063
        %v2075 = vsel %vm555, %v2063, %v2065
        %v2076 = vsel %vm555, %v2065, %v2067
        %v2077 = vsel %vm555, %v2067, %v2069
        %v2078 = vsel %vm555, %v2069, %v2071
        %v2087 = vsel %vm555, 0.0, %v2057
        %2088 = vrot.lane.b32.xlu0 %v1864, 31
        %v2089 = vpop.permute.xlu0 %2088
        %2090 = vrot.lane.b32.xlu0 %v1884, 31
        %v2091 = vpop.permute.xlu0 %2090
        %2092 = vrot.lane.b32.xlu0 %v1904, 31
        %v2093 = vpop.permute.xlu0 %2092
        %2094 = vrot.lane.b32.xlu0 %v1924, 31
        %v2095 = vpop.permute.xlu0 %2094
        %2096 = vrot.lane.b32.xlu0 %v1944, 31
        %v2097 = vpop.permute.xlu0 %2096
        %2098 = vrot.lane.b32.xlu0 %v1964, 31
        %v2099 = vpop.permute.xlu0 %2098
        %2100 = vrot.lane.b32.xlu0 %v1984, 31
        %v2101 = vpop.permute.xlu0 %2100
        %2102 = vrot.lane.b32.xlu0 %v2004, 31
        %v2103 = vpop.permute.xlu0 %2102
        %v2104 = vsel %vm1423, %v2089, %v2091
        %v2105 = vsel %vm1423, %v2091, %v2093
        %v2106 = vsel %vm1423, %v2093, %v2095
        %v2107 = vsel %vm1423, %v2095, %v2097
        %v2108 = vsel %vm1423, %v2097, %v2099
        %v2109 = vsel %vm1423, %v2099, %v2101
        %v2110 = vsel %vm1423, %v2101, %v2103
        %v2119 = vsel %vm1423, 0.0, %v2089
        %v2120 = vsel %vm1017, %v2119, 0.0
        %v2121 = vsel %vm1018, %v2104, 0.0
        %v2122 = vsel %vm1019, %v2105, 0.0
        %v2123 = vsel %vm1020, %v2106, 0.0
        %v2124 = vsel %vm1021, %v2107, 0.0
        %v2125 = vsel %vm1022, %v2108, 0.0
        %v2126 = vsel %vm1023, %v2109, 0.0
        %v2127 = vsel %vm1024, %v2110, 0.0
        %2128 = vrot.lane.b32.xlu0 %v1864, 1
        %v2129 = vpop.permute.xlu0 %2128
        %2130 = vrot.lane.b32.xlu0 %v1884, 1
        %v2131 = vpop.permute.xlu0 %2130
        %2132 = vrot.lane.b32.xlu0 %v1904, 1
        %v2133 = vpop.permute.xlu0 %2132
        %2134 = vrot.lane.b32.xlu0 %v1924, 1
        %v2135 = vpop.permute.xlu0 %2134
        %2136 = vrot.lane.b32.xlu0 %v1944, 1
        %v2137 = vpop.permute.xlu0 %2136
        %2138 = vrot.lane.b32.xlu0 %v1964, 1
        %v2139 = vpop.permute.xlu0 %2138
        %2140 = vrot.lane.b32.xlu0 %v1984, 1
        %v2141 = vpop.permute.xlu0 %2140
        %2142 = vrot.lane.b32.xlu0 %v2004, 1
        %v2143 = vpop.permute.xlu0 %2142
        %v2144 = vsel %vm814, %v2129, %v2131
        %v2145 = vsel %vm814, %v2131, %v2133
        %v2146 = vsel %vm814, %v2133, %v2135
        %v2147 = vsel %vm814, %v2135, %v2137
        %v2148 = vsel %vm814, %v2137, %v2139
        %v2149 = vsel %vm814, %v2139, %v2141
        %v2150 = vsel %vm814, %v2141, %v2143
        %v2159 = vsel %vm814, 0.0, %v2129
        %v2160 = vsel %vm847, %v2159, 0.0
        %v2161 = vsel %vm848, %v2144, 0.0
        %v2162 = vsel %vm849, %v2145, 0.0
        %v2163 = vsel %vm850, %v2146, 0.0
        %v2164 = vsel %vm851, %v2147, 0.0
        %v2165 = vsel %vm852, %v2148, 0.0
        %v2166 = vsel %vm853, %v2149, 0.0
        %v2167 = vsel %vm854, %v2150, 0.0
        %2168 = vrot.lane.b32.xlu0 %v1864, 127
        %v2169 = vpop.permute.xlu0 %2168
        %2170 = vrot.lane.b32.xlu0 %v1884, 127
        %v2171 = vpop.permute.xlu0 %2170
        %2172 = vrot.lane.b32.xlu0 %v1904, 127
        %v2173 = vpop.permute.xlu0 %2172
        %2174 = vrot.lane.b32.xlu0 %v1924, 127
        %v2175 = vpop.permute.xlu0 %2174
        %2176 = vrot.lane.b32.xlu0 %v1944, 127
        %v2177 = vpop.permute.xlu0 %2176
        %2178 = vrot.lane.b32.xlu0 %v1964, 127
        %v2179 = vpop.permute.xlu0 %2178
        %2180 = vrot.lane.b32.xlu0 %v1984, 127
        %v2181 = vpop.permute.xlu0 %2180
        %2182 = vrot.lane.b32.xlu0 %v2004, 127
        %v2183 = vpop.permute.xlu0 %2182
        %v2184 = vsel %vm984, %v2169, %v2171
        %v2185 = vsel %vm984, %v2171, %v2173
        %v2186 = vsel %vm984, %v2173, %v2175
        %v2187 = vsel %vm984, %v2175, %v2177
        %v2188 = vsel %vm984, %v2177, %v2179
        %v2189 = vsel %vm984, %v2179, %v2181
        %v2190 = vsel %vm984, %v2181, %v2183
        %v2199 = vsel %vm984, %v2183, 0.0
        %v2200 = vsel %vm1017, %v2184, 0.0
        %v2201 = vsel %vm1018, %v2185, 0.0
        %v2202 = vsel %vm1019, %v2186, 0.0
        %v2203 = vsel %vm1020, %v2187, 0.0
        %v2204 = vsel %vm1021, %v2188, 0.0
        %v2205 = vsel %vm1022, %v2189, 0.0
        %v2206 = vsel %vm1023, %v2190, 0.0
        %v2207 = vsel %vm1024, %v2199, 0.0
        %2208 = vrot.lane.b32.xlu0 %v1864, 97
        %v2209 = vpop.permute.xlu0 %2208
        %2210 = vrot.lane.b32.xlu0 %v1884, 97
        %v2211 = vpop.permute.xlu0 %2210
        %2212 = vrot.lane.b32.xlu0 %v1904, 97
        %v2213 = vpop.permute.xlu0 %2212
        %2214 = vrot.lane.b32.xlu0 %v1924, 97
        %v2215 = vpop.permute.xlu0 %2214
        %2216 = vrot.lane.b32.xlu0 %v1944, 97
        %v2217 = vpop.permute.xlu0 %2216
        %2218 = vrot.lane.b32.xlu0 %v1964, 97
        %v2219 = vpop.permute.xlu0 %2218
        %2220 = vrot.lane.b32.xlu0 %v1984, 97
        %v2221 = vpop.permute.xlu0 %2220
        %2222 = vrot.lane.b32.xlu0 %v2004, 97
        %v2223 = vpop.permute.xlu0 %2222
        %v2224 = vsel %vm1544, %v2209, %v2211
        %v2225 = vsel %vm1544, %v2211, %v2213
        %v2226 = vsel %vm1544, %v2213, %v2215
        %v2227 = vsel %vm1544, %v2215, %v2217
        %v2228 = vsel %vm1544, %v2217, %v2219
        %v2229 = vsel %vm1544, %v2219, %v2221
        %v2230 = vsel %vm1544, %v2221, %v2223
        %v2239 = vsel %vm1544, %v2223, 0.0
        %v2240 = vsel %vm847, %v2224, 0.0
        %v2241 = vsel %vm848, %v2225, 0.0
        %v2242 = vsel %vm849, %v2226, 0.0
        %v2243 = vsel %vm850, %v2227, 0.0
        %v2244 = vsel %vm851, %v2228, 0.0
        %v2245 = vsel %vm852, %v2229, 0.0
        %v2246 = vsel %vm853, %v2230, 0.0
        %v2247 = vsel %vm854, %v2239, 0.0
        %2248 = vrot.lane.b32.xlu0 %v1864, 96
        %v2249 = vpop.permute.xlu0 %2248
        %2250 = vrot.lane.b32.xlu0 %v1884, 96
        %v2251 = vpop.permute.xlu0 %2250
        %2252 = vrot.lane.b32.xlu0 %v1904, 96
        %v2253 = vpop.permute.xlu0 %2252
        %2254 = vrot.lane.b32.xlu0 %v1924, 96
        %v2255 = vpop.permute.xlu0 %2254
        %2256 = vrot.lane.b32.xlu0 %v1944, 96
        %v2257 = vpop.permute.xlu0 %2256
        %2258 = vrot.lane.b32.xlu0 %v1964, 96
        %v2259 = vpop.permute.xlu0 %2258
        %2260 = vrot.lane.b32.xlu0 %v1984, 96
        %v2261 = vpop.permute.xlu0 %2260
        %2262 = vrot.lane.b32.xlu0 %v2004, 96
        %v2263 = vpop.permute.xlu0 %2262
        %v2264 = vsel %vm661, %v2249, %v2251
        %v2265 = vsel %vm661, %v2251, %v2253
        %v2266 = vsel %vm661, %v2253, %v2255
        %v2267 = vsel %vm661, %v2255, %v2257
        %v2268 = vsel %vm661, %v2257, %v2259
        %v2269 = vsel %vm661, %v2259, %v2261
        %v2270 = vsel %vm661, %v2261, %v2263
        %v2279 = vsel %vm661, %v2263, 0.0
        %2280 = vrot.lane.b32.xlu0 %v1864, 95
        %v2281 = vpop.permute.xlu0 %2280
        %2282 = vrot.lane.b32.xlu0 %v1884, 95
        %v2283 = vpop.permute.xlu0 %2282
        %2284 = vrot.lane.b32.xlu0 %v1904, 95
        %v2285 = vpop.permute.xlu0 %2284
        %2286 = vrot.lane.b32.xlu0 %v1924, 95
        %v2287 = vpop.permute.xlu0 %2286
        %2288 = vrot.lane.b32.xlu0 %v1944, 95
        %v2289 = vpop.permute.xlu0 %2288
        %2290 = vrot.lane.b32.xlu0 %v1964, 95
        %v2291 = vpop.permute.xlu0 %2290
        %2292 = vrot.lane.b32.xlu0 %v1984, 95
        %v2293 = vpop.permute.xlu0 %2292
        %2294 = vrot.lane.b32.xlu0 %v2004, 95
        %v2295 = vpop.permute.xlu0 %2294
        %v2296 = vsel %vm1617, %v2281, %v2283
        %v2297 = vsel %vm1617, %v2283, %v2285
        %v2298 = vsel %vm1617, %v2285, %v2287
        %v2299 = vsel %vm1617, %v2287, %v2289
        %v2300 = vsel %vm1617, %v2289, %v2291
        %v2301 = vsel %vm1617, %v2291, %v2293
        %v2302 = vsel %vm1617, %v2293, %v2295
        %v2311 = vsel %vm1617, %v2295, 0.0
        %v2312 = vsel %vm1017, %v2296, 0.0
        %v2313 = vsel %vm1018, %v2297, 0.0
        %v2314 = vsel %vm1019, %v2298, 0.0
        %v2315 = vsel %vm1020, %v2299, 0.0
        %v2316 = vsel %vm1021, %v2300, 0.0
        %v2317 = vsel %vm1022, %v2301, 0.0
        %v2318 = vsel %vm1023, %v2302, 0.0
        %v2319 = vsel %vm1024, %v2311, 0.0
        %2321 = vset.pattern.permute.xlu0 0
        %2322 = vperm.xlu0 %2321, %v2007
        %v2323 = vpop.permute.xlu0 %2322
        %v2326 = vsel %vm1647, %v2006, 0
        %2328 = vmatpush.msra.mxu0 0.0
        %2329 = vmatpush.msra.mxu0 0.0
        %2330 = vmatpush.msra.mxu0 0.0
        %2331 = vmatpush.msra.mxu0 0.0
        %2332 = vmatpush.msra.mxu0 0.0
        %2333 = vmatpush.msra.mxu0 0.0
        %2334 = vmatpush.msra.mxu0 0.0
        %2335 = vmatpush.msra.mxu0 %v2312
        %2336 = vmatpush.msra.mxu0 %v2264
        %2337 = vmatpush.msra.mxu0 %v2240
        %2338 = vmatpush.msra.mxu0 %v2200
        %2339 = vmatpush.msra.mxu0 %v1864
        %2340 = vmatpush.msra.mxu0 %v2160
        %2341 = vmatpush.msra.mxu0 %v2120
        %2342 = vmatpush.msra.mxu0 %v2087
        %2343 = vmatpush.msra.mxu0 %v2048
        %2344 = vmatmul.f32.gmra.mxu0 %v2326
        %v2345 = vpop.f32.mrf.mxu0
        %v2346 = vadd.f32 %v2323, %v2345
        %2347 = vdwg.mxu0
        %2348 = vmatpush.msra.mxu0 0.0
        %2349 = vmatpush.msra.mxu0 0.0
        %2350 = vmatpush.msra.mxu0 0.0
        %2351 = vmatpush.msra.mxu0 0.0
        %2352 = vmatpush.msra.mxu0 0.0
        %2353 = vmatpush.msra.mxu0 0.0
        %2354 = vmatpush.msra.mxu0 0.0
        %2355 = vmatpush.msra.mxu0 %v2313
        %2356 = vmatpush.msra.mxu0 %v2265
        %2357 = vmatpush.msra.mxu0 %v2241
        %2358 = vmatpush.msra.mxu0 %v2201
        %2359 = vmatpush.msra.mxu0 %v1884
        %2360 = vmatpush.msra.mxu0 %v2161
        %2361 = vmatpush.msra.mxu0 %v2121
        %2362 = vmatpush.msra.mxu0 %v2072
        %2363 = vmatpush.msra.mxu0 %v2049
        %2364 = vmatmul.f32.gmra.mxu0 %v2326
        %v2365 = vpop.f32.mrf.mxu0
        %v2366 = vadd.f32 %v2323, %v2365
        %2367 = vdwg.mxu0
        %2368 = vmatpush.msra.mxu0 0.0
        %2369 = vmatpush.msra.mxu0 0.0
        %2370 = vmatpush.msra.mxu0 0.0
        %2371 = vmatpush.msra.mxu0 0.0
        %2372 = vmatpush.msra.mxu0 0.0
        %2373 = vmatpush.msra.mxu0 0.0
        %2374 = vmatpush.msra.mxu0 0.0
        %2375 = vmatpush.msra.mxu0 %v2314
        %2376 = vmatpush.msra.mxu0 %v2266
        %2377 = vmatpush.msra.mxu0 %v2242
        %2378 = vmatpush.msra.mxu0 %v2202
        %2379 = vmatpush.msra.mxu0 %v1904
        %2380 = vmatpush.msra.mxu0 %v2162
        %2381 = vmatpush.msra.mxu0 %v2122
        %2382 = vmatpush.msra.mxu0 %v2073
        %2383 = vmatpush.msra.mxu0 %v2050
        %2384 = vmatmul.f32.gmra.mxu0 %v2326
        %v2385 = vpop.f32.mrf.mxu0
        %v2386 = vadd.f32 %v2323, %v2385
        %2387 = vdwg.mxu0
        %2388 = vmatpush.msra.mxu0 0.0
        %2389 = vmatpush.msra.mxu0 0.0
        %2390 = vmatpush.msra.mxu0 0.0
        %2391 = vmatpush.msra.mxu0 0.0
        %2392 = vmatpush.msra.mxu0 0.0
        %2393 = vmatpush.msra.mxu0 0.0
        %2394 = vmatpush.msra.mxu0 0.0
        %2395 = vmatpush.msra.mxu0 %v2315
        %2396 = vmatpush.msra.mxu0 %v2267
        %2397 = vmatpush.msra.mxu0 %v2243
        %2398 = vmatpush.msra.mxu0 %v2203
        %2399 = vmatpush.msra.mxu0 %v1924
        %2400 = vmatpush.msra.mxu0 %v2163
        %2401 = vmatpush.msra.mxu0 %v2123
        %2402 = vmatpush.msra.mxu0 %v2074
        %2403 = vmatpush.msra.mxu0 %v2051
        %2404 = vmatmul.f32.gmra.mxu0 %v2326
        %v2405 = vpop.f32.mrf.mxu0
        %v2406 = vadd.f32 %v2323, %v2405
        %2407 = vdwg.mxu0
        %2408 = vmatpush.msra.mxu0 0.0
        %2409 = vmatpush.msra.mxu0 0.0
        %2410 = vmatpush.msra.mxu0 0.0
        %2411 = vmatpush.msra.mxu0 0.0
        %2412 = vmatpush.msra.mxu0 0.0
        %2413 = vmatpush.msra.mxu0 0.0
        %2414 = vmatpush.msra.mxu0 0.0
        %2415 = vmatpush.msra.mxu0 %v2316
        %2416 = vmatpush.msra.mxu0 %v2268
        %2417 = vmatpush.msra.mxu0 %v2244
        %2418 = vmatpush.msra.mxu0 %v2204
        %2419 = vmatpush.msra.mxu0 %v1944
        %2420 = vmatpush.msra.mxu0 %v2164
        %2421 = vmatpush.msra.mxu0 %v2124
        %2422 = vmatpush.msra.mxu0 %v2075
        %2423 = vmatpush.msra.mxu0 %v2052
        %2424 = vmatmul.f32.gmra.mxu0 %v2326
        %v2425 = vpop.f32.mrf.mxu0
        %v2426 = vadd.f32 %v2323, %v2425
        %2427 = vdwg.mxu0
        %2428 = vmatpush.msra.mxu0 0.0
        %2429 = vmatpush.msra.mxu0 0.0
        %2430 = vmatpush.msra.mxu0 0.0
        %2431 = vmatpush.msra.mxu0 0.0
        %2432 = vmatpush.msra.mxu0 0.0
        %2433 = vmatpush.msra.mxu0 0.0
        %2434 = vmatpush.msra.mxu0 0.0
        %2435 = vmatpush.msra.mxu0 %v2317
        %2436 = vmatpush.msra.mxu0 %v2269
        %2437 = vmatpush.msra.mxu0 %v2245
        %2438 = vmatpush.msra.mxu0 %v2205
        %2439 = vmatpush.msra.mxu0 %v1964
        %2440 = vmatpush.msra.mxu0 %v2165
        %2441 = vmatpush.msra.mxu0 %v2125
        %2442 = vmatpush.msra.mxu0 %v2076
        %2443 = vmatpush.msra.mxu0 %v2053
        %2444 = vmatmul.f32.gmra.mxu0 %v2326
        %v2445 = vpop.f32.mrf.mxu0
        %v2446 = vadd.f32 %v2323, %v2445
        %2447 = vdwg.mxu0
        %2448 = vmatpush.msra.mxu0 0.0
        %2449 = vmatpush.msra.mxu0 0.0
        %2450 = vmatpush.msra.mxu0 0.0
        %2451 = vmatpush.msra.mxu0 0.0
        %2452 = vmatpush.msra.mxu0 0.0
        %2453 = vmatpush.msra.mxu0 0.0
        %2454 = vmatpush.msra.mxu0 0.0
        %2455 = vmatpush.msra.mxu0 %v2318
        %2456 = vmatpush.msra.mxu0 %v2270
        %2457 = vmatpush.msra.mxu0 %v2246
        %2458 = vmatpush.msra.mxu0 %v2206
        %2459 = vmatpush.msra.mxu0 %v1984
        %2460 = vmatpush.msra.mxu0 %v2166
        %2461 = vmatpush.msra.mxu0 %v2126
        %2462 = vmatpush.msra.mxu0 %v2077
        %2463 = vmatpush.msra.mxu0 %v2054
        %2464 = vmatmul.f32.gmra.mxu0 %v2326
        %v2465 = vpop.f32.mrf.mxu0
        %v2466 = vadd.f32 %v2323, %v2465
        %2467 = vdwg.mxu0
        %2468 = vmatpush.msra.mxu0 0.0
        %2469 = vmatpush.msra.mxu0 0.0
        %2470 = vmatpush.msra.mxu0 0.0
        %2471 = vmatpush.msra.mxu0 0.0
        %2472 = vmatpush.msra.mxu0 0.0
        %2473 = vmatpush.msra.mxu0 0.0
        %2474 = vmatpush.msra.mxu0 0.0
        %2475 = vmatpush.msra.mxu0 %v2319
        %2476 = vmatpush.msra.mxu0 %v2279
        %2477 = vmatpush.msra.mxu0 %v2247
        %2478 = vmatpush.msra.mxu0 %v2207
        %2479 = vmatpush.msra.mxu0 %v2004
        %2480 = vmatpush.msra.mxu0 %v2167
        %2481 = vmatpush.msra.mxu0 %v2127
        %2482 = vmatpush.msra.mxu0 %v2078
        %2483 = vmatpush.msra.mxu0 %v2055
        %2484 = vmatmul.f32.gmra.mxu0 %v2326
        %v2485 = vpop.f32.mrf.mxu0
        %v2486 = vadd.f32 %v2323, %v2485
        %2487 = vdwg.mxu0
        %vm2488 = vcmp.ge.f32.partialorder %v2346, 0.0
        %vm2489 = vcmp.ge.f32.partialorder %v2366, 0.0
        %vm2490 = vcmp.ge.f32.partialorder %v2386, 0.0
        %vm2491 = vcmp.ge.f32.partialorder %v2406, 0.0
        %vm2492 = vcmp.ge.f32.partialorder %v2426, 0.0
        %vm2493 = vcmp.ge.f32.partialorder %v2446, 0.0
        %vm2494 = vcmp.ge.f32.partialorder %v2466, 0.0
        %vm2495 = vcmp.ge.f32.partialorder %v2486, 0.0
        %v2496 = vmul.f32 %v2346, 0.01
        %v2497 = vmul.f32 %v2366, 0.01
        %v2498 = vmul.f32 %v2386, 0.01
        %v2499 = vmul.f32 %v2406, 0.01
        %v2500 = vmul.f32 %v2426, 0.01
        %v2501 = vmul.f32 %v2446, 0.01
        %v2502 = vmul.f32 %v2466, 0.01
        %v2503 = vmul.f32 %v2486, 0.01
        %v2504 = vsel %vm2488, %v2346, %v2496
        %v2505 = vsel %vm2489, %v2366, %v2497
        %v2506 = vsel %vm2490, %v2386, %v2498
        %v2507 = vsel %vm2491, %v2406, %v2499
        %v2508 = vsel %vm2492, %v2426, %v2500
        %v2509 = vsel %vm2493, %v2446, %v2501
        %v2510 = vsel %vm2494, %v2466, %v2502
        %v2511 = vsel %vm2495, %v2486, %v2503
        %2512 = vst [vmem:[%s417] sm:$0xff] %v2504
        %2513 = vst [vmem:[%s417 + $0x8] sm:$0xff] %v2505
        %2514 = vst [vmem:[%s417 + $0x10] sm:$0xff] %v2506
        %2515 = vst [vmem:[%s417 + $0x18] sm:$0xff] %v2507
        %2516 = vst [vmem:[%s417 + $0x20] sm:$0xff] %v2508
        %2517 = vst [vmem:[%s417 + $0x28] sm:$0xff] %v2509
        %2518 = vst [vmem:[%s417 + $0x30] sm:$0xff] %v2510
        %2519 = vst [vmem:[%s417 + $0x38] sm:$0xff] %v2511
        %s2520 = sand.u32 %s258, 1
        %s2521 = scalar_lea.sflag [#allocation4], %s2520
        %s2522 = sand.u32 %s258, 1
        %s2523 = smul.addr %s2522, 64
        %s2524 = scalar_lea.vmem [#allocation7], %s2523
        // Predicated region
        $region69: #{tpu_custom_call.1} parent=59 // pred_check
          %p2525 = pneg %p268
        $region70: #{tpu_custom_call.1} parent=59 // pred_check_branch
          %2527 = sbr.rel (%p2525) target = $region72
        $region71: #{tpu_custom_call.1} parent=59 // pred_region
          %2529 = vsyncadd %s2521, 0
          %s2530 = smul.addr %s30, 8
          %s2531 = smul.addr %s2530, 8
          %s2532 = scalar_lea.hbm %s10, %s2531
          %s2534 = sshll.u32 %s2524, 4
          %s2535 = int_to_ptr.vmem [resolvable:$true] %s2534
          %s2536 = sshll.u32 %s2532, 4
          %s2537 = int_to_ptr.hbm [resolvable:$true] %s2536
          %2539 = dma.vmem_to_hbm [thread:$0]  %s2535, 1024, %s2537, %s2521
        $region72: #{tpu_custom_call.1} parent=59 // pred_fallthru
          _
      $region60: #{tpu_custom_call.1} parent=5 // pred_fallthru
        _
      %p2540 = scmp.le.s32.totalorder 2, %s25
      // Predicated region
      $region73: #{tpu_custom_call.1} parent=5 // pred_check
        %p2541 = pneg %p2540
      $region74: #{tpu_custom_call.1} parent=5 // pred_check_branch
        %2543 = sbr.rel (%p2541) target = $region76
      $region75: #{tpu_custom_call.1} parent=5 // pred_region
        %s2544 = ssub.s32 %s25, 2
        // Predicated region
        $region77: #{tpu_custom_call.1} parent=75 // pred_check
          %p2545 = pneg %p274
        $region78: #{tpu_custom_call.1} parent=75 // pred_check_branch
          %2547 = sbr.rel (%p2545) target = $region80
        $region79: #{tpu_custom_call.1} parent=75 // pred_region
          %s2548 = sand.u32 %s259, 1
          %s2549 = scalar_lea.sflag [#allocation4], %s2548
          %s2550 = sand.u32 %s259, 1
          %s2551 = smul.addr %s2550, 64
          %s2552 = scalar_lea.vmem [#allocation7], %s2551
          %2554 = dma.done %s2549, 1024
        $region80: #{tpu_custom_call.1} parent=75 // pred_fallthru
          _
      $region76: #{tpu_custom_call.1} parent=5 // pred_fallthru
        _
    $region6: #{tpu_custom_call.1} parent=1 // loop_footer
      %s29 = sadd.s32 1, %s25
    $region7: #{tpu_custom_call.1} parent=1 // loop_footer_branch
      %24 = sbr.rel target = $region3
    $region8: #{tpu_custom_call.1} parent=1 // loop_exit
      _
    %2555 = vsyncpa [#allocation3], 1
    %s2556 = scalar_lea.sflag [#allocation3], 1
    %2557 = vsyncpa %s2556, 1
    %2558 = vsyncpa [#allocation6], 1
    %s2559 = scalar_lea.sflag [#allocation6], 1
    %2560 = vsyncpa %s2559, 1
    %2561 = vsyncpa [#allocation4], 1
    %s2562 = scalar_lea.sflag [#allocation4], 1
    %2563 = vsyncpa %s2562, 1

</llo_original>
